<compile_context>
chip_gen: v6e
topology: v6e:2x2x1
jax: 0.10.0
libtpu: 0.0.40
codegen_flags: <defaults>
</compile_context>

<pallas_src>
import numpy as np
import jax
import jax.numpy as jnp
from jax.experimental import pallas as pl
from jax.experimental.pallas import tpu as pltpu


CFG = dict(
    cnn_activ="relu", policy_activ="relu", value_activ="relu", feature_activ="tanh",
    output_channels=8, conv_kernel=3, conv_stride=1, pool_kernel=2, pool_stride=2,
    cnn_output=32, feature_hidden=32, feature_output=16, value_hidden=32,
    latent_pi_dim=150, latent_vf_dim=1,
)

_HEAD_PAD = 128    # lane-aligned column where the policy block starts (head weight AND output slab)
_OUT_WIDTH = 384   # lane-dense output slab width (3 x 128 lanes)
_SB = 32           # row band stride of the packed small-weight slab


def _dims(matrix_shape, cfg):
    C, H, W = matrix_shape
    K, cs, ps = cfg["conv_kernel"], cfg["conv_stride"], cfg["pool_stride"]
    O = cfg["output_channels"]
    Ho = (H - K) // cs + 1
    Wo = (W - K) // cs + 1
    Hp, Wp = Ho // ps, Wo // ps
    return dict(C=C, H=H, W=W, K=K, cs=cs, ps=ps, O=O, Ho=Ho, Wo=Wo, Hp=Hp, Wp=Wp,
                CKK=C * K * K, WPO=Wp * O, BD=Wp * C * K * K)


# ----------------------------------------------------------------------------
# XLA-side layout plumbing (one fusion; XLA cannot fuse producers into a Pallas call)
# ----------------------------------------------------------------------------
def build_patches(x, d):
    """x:(B,C,H,W) -> (ps*ps, Hp*B, Wp*C*K*K); rows ordered (hp, b), cols (wp, c, kh, kw).
    TODO(synk): im2col is kept as XLA layout plumbing (one ~56 KB materialization per
    forward) rather than in-kernel strided gathers, which would be fragile to lower."""
    B = x.shape[0]
    K, cs, ps, Hp, Wp, C = d["K"], d["cs"], d["ps"], d["Hp"], d["Wp"], d["C"]
    step = ps * cs
    xt = x.transpose(2, 0, 3, 1)                                   # (H, B, W, C), tiny one-time transpose
    slots = []
    for ph in range(ps):
        for pw in range(ps):
            taps = []
            for kh in range(K):
                for kw in range(K):
                    h0 = ph * cs + kh
                    w0 = pw * cs + kw
                    taps.append(xt[h0:h0 + step * (Hp - 1) + 1:step, :,
                                   w0:w0 + step * (Wp - 1) + 1:step, :])   # (Hp, B, Wp, C)
            t = jnp.stack(taps, axis=-1)                           # (Hp, B, Wp, C, K*K)
            slots.append(t.reshape(Hp * B, Wp * C * K * K))
    return jnp.stack(slots, axis=0)                                # (ps*ps, Hp*B, Wp*C*K*K)


# ----------------------------------------------------------------------------
# The single fused kernel
# ----------------------------------------------------------------------------
def fused_forward(patches, feats, conv_slab, lin_w, head_w, small, cfg, d):
    B = feats.shape[0]
    P = d["ps"] * d["ps"]
    Hp, WPO, BD = d["Hp"], d["WPO"], d["BD"]
    FI = feats.shape[1]
    FH, FO, VH = cfg["feature_hidden"], cfg["feature_output"], cfg["value_hidden"]
    D, NP = cfg["cnn_output"], cfg["latent_pi_dim"]
    assert _HEAD_PAD + NP <= _OUT_WIDTH and FO + D + 1 <= _HEAD_PAD

    def kernel(p_ref, f_ref, cw_ref, lw_ref, hw_ref, sm_ref, o_ref):
        dot = lambda a, b: jnp.dot(a, b, preferred_element_type=jnp.float32)

        # ---- conv (im2col GEMM, wp folded into lanes) + maxpool + bias + relu ----
        # bias hoisted out of the slot loop: max_s(z_s)+b == max_s(z_s+b);
        # relu(maxpool(.)) == maxpool(relu(.)) — both exact for ReLU.
        w_bd = cw_ref[0:BD, :]                                        # (Wp*CKK, Wp*O)
        acc = dot(p_ref[0], w_bd)
        for s in range(1, P):
            acc = jnp.maximum(acc, dot(p_ref[s], w_bd))
        pooled = jnp.maximum(acc + cw_ref[BD:BD + 1, :], 0.0)         # (Hp*B, Wp*O)

        # ---- flatten + Linear(n_flatten->32, bias=False) + relu ----
        # reshape-free: rows of `pooled` are (hp, b), lanes are (wp, o); accumulate
        # Hp small GEMMs over static sublane slices against the row-permuted lin_w.
        cnn_pre = dot(pooled[0:B, :], lw_ref[0:WPO, :])
        for hp in range(1, Hp):
            cnn_pre = cnn_pre + dot(pooled[hp * B:(hp + 1) * B, :],
                                    lw_ref[hp * WPO:(hp + 1) * WPO, :])
        cnn_emb = jnp.maximum(cnn_pre, 0.0)                           # (B, 32)

        # ---- feature MLP: 3x (Linear bias=False, tanh) ----
        f = jnp.tanh(dot(f_ref[...], sm_ref[0:FI, 0:FH]))
        f = jnp.tanh(dot(f, sm_ref[_SB:_SB + FH, 0:FH]))
        d_old = jnp.tanh(dot(f, sm_ref[3 * _SB:3 * _SB + FH, 0:FO]))  # (B, 16)

        # ---- merged head GEMM on the split embedding (no lane concat) ----
        # head_w cols [0:VH] = value hidden-1, cols [128:128+NP] = policy logits.
        h = dot(d_old, hw_ref[0:FO, :]) + dot(cnn_emb, hw_ref[FO:FO + D, :])
        v = jnp.maximum(h[:, 0:VH], 0.0)
        v = jnp.maximum(dot(v, sm_ref[2 * _SB:2 * _SB + VH, 0:VH]), 0.0)
        value = dot(v, sm_ref[3 * _SB:3 * _SB + VH, FO:FO + 1]) + sm_ref[FI:FI + 1, 0:1]

        logits = h[:, _HEAD_PAD:_HEAD_PAD + NP]                       # (B, 150), already 128-aligned
        m = jnp.max(logits, axis=-1, keepdims=True)
        lse = jnp.log(jnp.sum(jnp.exp(logits - m), axis=-1, keepdims=True))
        logp = logits - m - lse

        # ---- direct stores at fixed column offsets (no concatenate, no zero pad) ----
        # unwritten lanes of the output slab are never read by the wrapper.
        o_ref[:, 0:FO] = d_old
        o_ref[:, FO:FO + D] = cnn_emb
        o_ref[:, FO + D:FO + D + 1] = value
        o_ref[:, _HEAD_PAD:_HEAD_PAD + NP] = logp

    args = (patches, feats, conv_slab, lin_w, head_w, small)
    in_specs = [pl.BlockSpec(a.shape, lambda i, n=a.ndim: (0,) * n) for a in args]
    return pl.pallas_call(
        kernel,
        out_shape=jax.ShapeDtypeStruct((B, _OUT_WIDTH), jnp.float32),
        grid=(1,),
        in_specs=in_specs,
        out_specs=pl.BlockSpec((B, _OUT_WIDTH), lambda i: (0, 0)),
        compiler_params=pltpu.CompilerParams(dimension_semantics=("arbitrary",)),
    )(*args)


# ----------------------------------------------------------------------------
# Parameters
# ----------------------------------------------------------------------------
def init_params(key, matrix_shape, features_shape, cfg):
    d = _dims(matrix_shape, cfg)
    C, K, O, Hp, Wp = d["C"], d["K"], d["O"], d["Hp"], d["Wp"]
    n_flatten = O * Hp * Wp
    feature_input = int(np.prod(features_shape))
    input_dim = cfg["cnn_output"] + cfg["feature_output"]

    def u(k, shape, fan_in):
        bound = 1.0 / np.sqrt(fan_in)
        return jax.random.uniform(k, shape, jnp.float32, -bound, bound)

    ks = jax.random.split(key, 11)
    return {
        "conv_w": u(ks[0], (O, C, K, K), C * K * K),
        "conv_b": u(ks[1], (O,), C * K * K),
        "feat_w1": u(ks[2], (feature_input, cfg["feature_hidden"]), feature_input),
        "feat_w2": u(ks[3], (cfg["feature_hidden"], cfg["feature_hidden"]), cfg["feature_hidden"]),
        "feat_w3": u(ks[4], (cfg["feature_hidden"], cfg["feature_output"]), cfg["feature_hidden"]),
        "lin_w": u(ks[5], (n_flatten, cfg["cnn_output"]), n_flatten),
        "val_w1": u(ks[6], (input_dim, cfg["value_hidden"]), input_dim),
        "val_w2": u(ks[7], (cfg["value_hidden"], cfg["value_hidden"]), cfg["value_hidden"]),
        "val_w3": u(ks[8], (cfg["value_hidden"], cfg["latent_vf_dim"]), cfg["value_hidden"]),
        "val_b3": u(ks[9], (cfg["latent_vf_dim"],), cfg["value_hidden"]),
        "pol_w": u(ks[10], (input_dim, cfg["latent_pi_dim"]), input_dim),
    }


def prepare_params(params, matrix_shape, cfg):
    """One-time parameter re-layouts, hoisted out of the per-step forward trace."""
    d = _dims(matrix_shape, cfg)
    O, Hp, Wp, CKK = d["O"], d["Hp"], d["Wp"], d["CKK"]
    D = cfg["cnn_output"]
    FI = params["feat_w1"].shape[0]
    FH, FO, VH, NP = cfg["feature_hidden"], cfg["feature_output"], cfg["value_hidden"], cfg["latent_pi_dim"]

    # (a) conv weight as a wp-block-diagonal GEMM weight: rows (wp, c, kh, kw),
    #     cols (wp, o); conv bias appended as one extra row -> single operand.
    w_flat = params["conv_w"].reshape(O, CKK).T                     # (CKK, O), rows (c, kh, kw)
    w_bd = jnp.zeros((Wp * CKK, Wp * O), jnp.float32)
    for wp in range(Wp):
        w_bd = w_bd.at[wp * CKK:(wp + 1) * CKK, wp * O:(wp + 1) * O].set(w_flat)
    bias_row = jnp.tile(params["conv_b"], Wp).reshape(1, Wp * O)    # bias[(wp, o)] = conv_b[o]
    conv_slab = jnp.concatenate([w_bd, bias_row], axis=0)           # (Wp*CKK + 1, Wp*O)

    # (b) post-flatten Linear, rows permuted from torch NCHW flatten (o, hp, wp)
    #     to the kernel's (hp, wp, o) contraction order.
    lin_w = (params["lin_w"].reshape(O, Hp, Wp, D)
             .transpose(1, 2, 0, 3).reshape(Hp * Wp * O, D))

    # (c) merged head weight: value hidden-1 at cols [0:VH], policy at lane-aligned [128:].
    head_w = jnp.zeros((FO + D, _HEAD_PAD + NP), jnp.float32)
    head_w = head_w.at[:, :VH].set(params["val_w1"])
    head_w = head_w.at[:, _HEAD_PAD:].set(params["pol_w"])

    # (d) all tiny MLP weights packed in one (128, 32) slab (static 32-row bands).
    assert FI + 1 <= _SB and FH <= _SB and VH <= _SB and FO + 1 <= _SB
    small = jnp.zeros((4 * _SB, _SB), jnp.float32)
    small = small.at[0:FI, 0:FH].set(params["feat_w1"])
    small = small.at[FI:FI + 1, 0:1].set(params["val_b3"].reshape(1, 1))
    small = small.at[_SB:_SB + FH, 0:FH].set(params["feat_w2"])
    small = small.at[2 * _SB:2 * _SB + VH, 0:VH].set(params["val_w2"])
    small = small.at[3 * _SB:3 * _SB + FH, 0:FO].set(params["feat_w3"])
    small = small.at[3 * _SB:3 * _SB + VH, FO:FO + 1].set(params["val_w3"])

    return dict(conv_slab=conv_slab, lin_w=lin_w, head_w=head_w, small=small)


# ----------------------------------------------------------------------------
# Forward
# ----------------------------------------------------------------------------
def forward(prepped, matrix, features):
    cfg = CFG
    assert cfg["pool_kernel"] == cfg["pool_stride"]                 # non-overlapping pooling
    d = _dims(matrix.shape[1:], cfg)
    matrix = matrix.astype(jnp.float32)
    feats = features.reshape(features.shape[0], -1).astype(jnp.float32)

    patches = build_patches(matrix, d)                              # layout plumbing only
    # NOTE: at large batch, feed patches/weights as bf16 (f32 accumulation) and add a
    # parallel batch grid axis for v7x's two TensorCores; at B=2 both are pure overhead.
    slab = fused_forward(patches, feats, prepped["conv_slab"], prepped["lin_w"],
                         prepped["head_w"], prepped["small"], cfg, d)

    emb_dim = cfg["feature_output"] + cfg["cnn_output"]
    final_embedding = slab[:, :emb_dim]
    value = slab[:, emb_dim:emb_dim + 1]
    output = slab[:, _HEAD_PAD:_HEAD_PAD + cfg["latent_pi_dim"]]
    return final_embedding, value, output


# ----------------------------------------------------------------------------
# Pure-JAX reference (mirrors the PyTorch module) for a correctness check
# ----------------------------------------------------------------------------
def reference_forward(params, matrix, features, cfg):
    hi = jax.lax.Precision.HIGHEST
    dot = lambda a, b: jnp.dot(a, b, precision=hi)
    B = matrix.shape[0]
    O, pool = cfg["output_channels"], cfg["pool_stride"]

    f = features.reshape(B, -1)
    f = jnp.tanh(dot(f, params["feat_w1"]))
    f = jnp.tanh(dot(f, params["feat_w2"]))
    d_old = jnp.tanh(dot(f, params["feat_w3"]))

    y = jax.lax.conv_general_dilated(
        matrix, params["conv_w"], window_strides=(cfg["conv_stride"],) * 2,
        padding="VALID", dimension_numbers=("NCHW", "OIHW", "NCHW"), precision=hi)
    y = jnp.maximum(y + params["conv_b"].reshape(1, O, 1, 1), 0.0)
    _, _, Ho, Wo = y.shape
    Hp, Wp = Ho // pool, Wo // pool
    y = y[:, :, :Hp * pool, :Wp * pool].reshape(B, O, Hp, pool, Wp, pool).max(axis=(3, 5))
    cnn_emb = jnp.maximum(dot(y.reshape(B, -1), params["lin_w"]), 0.0)

    emb = jnp.concatenate([d_old, cnn_emb], axis=1)
    v = jnp.maximum(dot(emb, params["val_w1"]), 0.0)
    v = jnp.maximum(dot(v, params["val_w2"]), 0.0)
    value = dot(v, params["val_w3"]) + params["val_b3"]
    output = jax.nn.log_softmax(dot(emb, params["pol_w"]), axis=-1)
    return emb, value, output


# ----------------------------------------------------------------------------
if __name__ == "__main__":
    B = 2
    matrix_shape = (4, 16, 16)   # observation_space['matrix'].shape  (C, H, W)
    features_shape = (8,)        # observation_space['features'].shape

    root = jax.random.PRNGKey(0)
    kp, kx, kf = jax.random.split(root, 3)

    params = init_params(kp, matrix_shape, features_shape, CFG)
    prepped = prepare_params(params, matrix_shape, CFG)             # one-time re-layouts

    matrix = jax.random.normal(kx, (B,) + matrix_shape, jnp.float32)
    features = jax.random.normal(kf, (B,) + features_shape, jnp.float32)

    fwd = jax.jit(forward)
    final_embedding, value, output = fwd(prepped, matrix, features)
    jax.block_until_ready((final_embedding, value, output))

    assert final_embedding.shape == (B, CFG["cnn_output"] + CFG["feature_output"])
    assert value.shape == (B, CFG["latent_vf_dim"])
    assert output.shape == (B, CFG["latent_pi_dim"])
    # log-softmax rows must exponentiate-sum to 1
    np.testing.assert_allclose(np.exp(np.asarray(output)).sum(-1), np.ones(B), rtol=1e-4)

    # correctness vs plain-JAX reference of the PyTorch module
    ref_emb, ref_val, ref_out = reference_forward(params, matrix, features, CFG)
    np.testing.assert_allclose(np.asarray(final_embedding), np.asarray(ref_emb), rtol=2e-3, atol=2e-3)
    np.testing.assert_allclose(np.asarray(value), np.asarray(ref_val), rtol=2e-3, atol=2e-3)
    np.testing.assert_allclose(np.asarray(output), np.asarray(ref_out), rtol=2e-3, atol=2e-3)

    print("KERNEL_OK")
</pallas_src>

<mosaic_0001>
module attributes {stable_mosaic.version = 11 : i64} {
  func.func @kernel(%arg0: i32, %arg1: memref<4x14x252xf32, #tpu.memory_space<vmem>>, %arg2: memref<2x8xf32, #tpu.memory_space<vmem>>, %arg3: memref<253x56xf32, #tpu.memory_space<vmem>>, %arg4: memref<392x32xf32, #tpu.memory_space<vmem>>, %arg5: memref<48x278xf32, #tpu.memory_space<vmem>>, %arg6: memref<128x32xf32, #tpu.memory_space<vmem>>, %arg7: memref<2x384xf32, #tpu.memory_space<vmem>>) attributes {dimension_semantics = [#tpu.dimension_semantics<arbitrary>], iteration_bounds = array<i64: 1>, scalar_prefetch = 0 : i64, scratch_operands = 0 : i64, tpu.core_type = #tpu.core_type<tc>, window_params = [{pipeline_mode = #tpu.pipeline_mode<synchronous>, transform_indices = @transform_0, window_bounds = array<i64: 4, 14, 252>}, {pipeline_mode = #tpu.pipeline_mode<synchronous>, transform_indices = @transform_1, window_bounds = array<i64: 2, 8>}, {pipeline_mode = #tpu.pipeline_mode<synchronous>, transform_indices = @transform_2, window_bounds = array<i64: 253, 56>}, {pipeline_mode = #tpu.pipeline_mode<synchronous>, transform_indices = @transform_3, window_bounds = array<i64: 392, 32>}, {pipeline_mode = #tpu.pipeline_mode<synchronous>, transform_indices = @transform_4, window_bounds = array<i64: 48, 278>}, {pipeline_mode = #tpu.pipeline_mode<synchronous>, transform_indices = @transform_5, window_bounds = array<i64: 128, 32>}, {pipeline_mode = #tpu.pipeline_mode<synchronous>, transform_indices = @transform_6, window_bounds = array<i64: 2, 384>}]} {
    %c0 = arith.constant 0 : index
    %c0_0 = arith.constant 0 : index
    %0 = vector.load %arg3[%c0, %c0_0] : memref<253x56xf32, #tpu.memory_space<vmem>>, vector<252x56xf32>
    %c0_1 = arith.constant 0 : index
    %c0_2 = arith.constant 0 : index
    %c0_3 = arith.constant 0 : index
    %1 = vector.load %arg1[%c0_1, %c0_2, %c0_3] : memref<4x14x252xf32, #tpu.memory_space<vmem>>, vector<1x14x252xf32>
    %2 = vector.shape_cast %1 : vector<1x14x252xf32> to vector<14x252xf32>
    %cst = arith.constant dense<0.000000e+00> : vector<14x56xf32>
    %3 = tpu.matmul %2, %0, %cst {dimension_numbers = #tpu.dot_dimension_numbers<[1], [0], [0], [1], [0, 0, 1, 1], [], []>} : vector<14x252xf32>, vector<252x56xf32>, vector<14x56xf32> -> vector<14x56xf32>
    %c1 = arith.constant 1 : index
    %c0_4 = arith.constant 0 : index
    %c0_5 = arith.constant 0 : index
    %4 = vector.load %arg1[%c1, %c0_4, %c0_5] : memref<4x14x252xf32, #tpu.memory_space<vmem>>, vector<1x14x252xf32>
    %5 = vector.shape_cast %4 : vector<1x14x252xf32> to vector<14x252xf32>
    %cst_6 = arith.constant dense<0.000000e+00> : vector<14x56xf32>
    %6 = tpu.matmul %5, %0, %cst_6 {dimension_numbers = #tpu.dot_dimension_numbers<[1], [0], [0], [1], [0, 0, 1, 1], [], []>} : vector<14x252xf32>, vector<252x56xf32>, vector<14x56xf32> -> vector<14x56xf32>
    %7 = arith.maximumf %3, %6 : vector<14x56xf32>
    %c2 = arith.constant 2 : index
    %c0_7 = arith.constant 0 : index
    %c0_8 = arith.constant 0 : index
    %8 = vector.load %arg1[%c2, %c0_7, %c0_8] : memref<4x14x252xf32, #tpu.memory_space<vmem>>, vector<1x14x252xf32>
    %9 = vector.shape_cast %8 : vector<1x14x252xf32> to vector<14x252xf32>
    %cst_9 = arith.constant dense<0.000000e+00> : vector<14x56xf32>
    %10 = tpu.matmul %9, %0, %cst_9 {dimension_numbers = #tpu.dot_dimension_numbers<[1], [0], [0], [1], [0, 0, 1, 1], [], []>} : vector<14x252xf32>, vector<252x56xf32>, vector<14x56xf32> -> vector<14x56xf32>
    %11 = arith.maximumf %7, %10 : vector<14x56xf32>
    %c3 = arith.constant 3 : index
    %c0_10 = arith.constant 0 : index
    %c0_11 = arith.constant 0 : index
    %12 = vector.load %arg1[%c3, %c0_10, %c0_11] : memref<4x14x252xf32, #tpu.memory_space<vmem>>, vector<1x14x252xf32>
    %13 = vector.shape_cast %12 : vector<1x14x252xf32> to vector<14x252xf32>
    %cst_12 = arith.constant dense<0.000000e+00> : vector<14x56xf32>
    %14 = tpu.matmul %13, %0, %cst_12 {dimension_numbers = #tpu.dot_dimension_numbers<[1], [0], [0], [1], [0, 0, 1, 1], [], []>} : vector<14x252xf32>, vector<252x56xf32>, vector<14x56xf32> -> vector<14x56xf32>
    %15 = arith.maximumf %11, %14 : vector<14x56xf32>
    %c252 = arith.constant 252 : index
    %c0_13 = arith.constant 0 : index
    %16 = vector.load %arg3[%c252, %c0_13] : memref<253x56xf32, #tpu.memory_space<vmem>>, vector<1x56xf32>
    %17 = vector.broadcast %16 : vector<1x56xf32> to vector<14x56xf32>
    %18 = arith.addf %15, %17 : vector<14x56xf32>
    %cst_14 = arith.constant 0.000000e+00 : f32
    %19 = vector.broadcast %cst_14 : f32 to vector<14x56xf32>
    %20 = arith.maximumf %18, %19 : vector<14x56xf32>
    %21 = vector.extract_strided_slice %20 {offsets = [0, 0], sizes = [2, 56], strides = [1, 1]} : vector<14x56xf32> to vector<2x56xf32>
    %c0_15 = arith.constant 0 : index
    %c0_16 = arith.constant 0 : index
    %22 = vector.load %arg4[%c0_15, %c0_16] : memref<392x32xf32, #tpu.memory_space<vmem>>, vector<56x32xf32>
    %cst_17 = arith.constant dense<0.000000e+00> : vector<2x32xf32>
    %23 = tpu.matmul %21, %22, %cst_17 {dimension_numbers = #tpu.dot_dimension_numbers<[1], [0], [0], [1], [0, 0, 1, 1], [], []>} : vector<2x56xf32>, vector<56x32xf32>, vector<2x32xf32> -> vector<2x32xf32>
    %24 = vector.extract_strided_slice %20 {offsets = [2, 0], sizes = [2, 56], strides = [1, 1]} : vector<14x56xf32> to vector<2x56xf32>
    %c56 = arith.constant 56 : index
    %c0_18 = arith.constant 0 : index
    %25 = vector.load %arg4[%c56, %c0_18] : memref<392x32xf32, #tpu.memory_space<vmem>>, vector<56x32xf32>
    %cst_19 = arith.constant dense<0.000000e+00> : vector<2x32xf32>
    %26 = tpu.matmul %24, %25, %cst_19 {dimension_numbers = #tpu.dot_dimension_numbers<[1], [0], [0], [1], [0, 0, 1, 1], [], []>} : vector<2x56xf32>, vector<56x32xf32>, vector<2x32xf32> -> vector<2x32xf32>
    %27 = arith.addf %23, %26 : vector<2x32xf32>
    %28 = vector.extract_strided_slice %20 {offsets = [4, 0], sizes = [2, 56], strides = [1, 1]} : vector<14x56xf32> to vector<2x56xf32>
    %c112 = arith.constant 112 : index
    %c0_20 = arith.constant 0 : index
    %29 = vector.load %arg4[%c112, %c0_20] : memref<392x32xf32, #tpu.memory_space<vmem>>, vector<56x32xf32>
    %cst_21 = arith.constant dense<0.000000e+00> : vector<2x32xf32>
    %30 = tpu.matmul %28, %29, %cst_21 {dimension_numbers = #tpu.dot_dimension_numbers<[1], [0], [0], [1], [0, 0, 1, 1], [], []>} : vector<2x56xf32>, vector<56x32xf32>, vector<2x32xf32> -> vector<2x32xf32>
    %31 = arith.addf %27, %30 : vector<2x32xf32>
    %32 = vector.extract_strided_slice %20 {offsets = [6, 0], sizes = [2, 56], strides = [1, 1]} : vector<14x56xf32> to vector<2x56xf32>
    %c168 = arith.constant 168 : index
    %c0_22 = arith.constant 0 : index
    %33 = vector.load %arg4[%c168, %c0_22] : memref<392x32xf32, #tpu.memory_space<vmem>>, vector<56x32xf32>
    %cst_23 = arith.constant dense<0.000000e+00> : vector<2x32xf32>
    %34 = tpu.matmul %32, %33, %cst_23 {dimension_numbers = #tpu.dot_dimension_numbers<[1], [0], [0], [1], [0, 0, 1, 1], [], []>} : vector<2x56xf32>, vector<56x32xf32>, vector<2x32xf32> -> vector<2x32xf32>
    %35 = arith.addf %31, %34 : vector<2x32xf32>
    %36 = vector.extract_strided_slice %20 {offsets = [8, 0], sizes = [2, 56], strides = [1, 1]} : vector<14x56xf32> to vector<2x56xf32>
    %c224 = arith.constant 224 : index
    %c0_24 = arith.constant 0 : index
    %37 = vector.load %arg4[%c224, %c0_24] : memref<392x32xf32, #tpu.memory_space<vmem>>, vector<56x32xf32>
    %cst_25 = arith.constant dense<0.000000e+00> : vector<2x32xf32>
    %38 = tpu.matmul %36, %37, %cst_25 {dimension_numbers = #tpu.dot_dimension_numbers<[1], [0], [0], [1], [0, 0, 1, 1], [], []>} : vector<2x56xf32>, vector<56x32xf32>, vector<2x32xf32> -> vector<2x32xf32>
    %39 = arith.addf %35, %38 : vector<2x32xf32>
    %40 = vector.extract_strided_slice %20 {offsets = [10, 0], sizes = [2, 56], strides = [1, 1]} : vector<14x56xf32> to vector<2x56xf32>
    %c280 = arith.constant 280 : index
    %c0_26 = arith.constant 0 : index
    %41 = vector.load %arg4[%c280, %c0_26] : memref<392x32xf32, #tpu.memory_space<vmem>>, vector<56x32xf32>
    %cst_27 = arith.constant dense<0.000000e+00> : vector<2x32xf32>
    %42 = tpu.matmul %40, %41, %cst_27 {dimension_numbers = #tpu.dot_dimension_numbers<[1], [0], [0], [1], [0, 0, 1, 1], [], []>} : vector<2x56xf32>, vector<56x32xf32>, vector<2x32xf32> -> vector<2x32xf32>
    %43 = arith.addf %39, %42 : vector<2x32xf32>
    %44 = vector.extract_strided_slice %20 {offsets = [12, 0], sizes = [2, 56], strides = [1, 1]} : vector<14x56xf32> to vector<2x56xf32>
    %c336 = arith.constant 336 : index
    %c0_28 = arith.constant 0 : index
    %45 = vector.load %arg4[%c336, %c0_28] : memref<392x32xf32, #tpu.memory_space<vmem>>, vector<56x32xf32>
    %cst_29 = arith.constant dense<0.000000e+00> : vector<2x32xf32>
    %46 = tpu.matmul %44, %45, %cst_29 {dimension_numbers = #tpu.dot_dimension_numbers<[1], [0], [0], [1], [0, 0, 1, 1], [], []>} : vector<2x56xf32>, vector<56x32xf32>, vector<2x32xf32> -> vector<2x32xf32>
    %47 = arith.addf %43, %46 : vector<2x32xf32>
    %cst_30 = arith.constant 0.000000e+00 : f32
    %48 = vector.broadcast %cst_30 : f32 to vector<2x32xf32>
    %49 = arith.maximumf %47, %48 : vector<2x32xf32>
    %c0_31 = arith.constant 0 : index
    %c0_32 = arith.constant 0 : index
    %50 = vector.load %arg2[%c0_31, %c0_32] : memref<2x8xf32, #tpu.memory_space<vmem>>, vector<2x8xf32>
    %c0_33 = arith.constant 0 : index
    %c0_34 = arith.constant 0 : index
    %51 = vector.load %arg6[%c0_33, %c0_34] : memref<128x32xf32, #tpu.memory_space<vmem>>, vector<8x32xf32>
    %cst_35 = arith.constant dense<0.000000e+00> : vector<2x32xf32>
    %52 = tpu.matmul %50, %51, %cst_35 {dimension_numbers = #tpu.dot_dimension_numbers<[1], [0], [0], [1], [0, 0, 1, 1], [], []>} : vector<2x8xf32>, vector<8x32xf32>, vector<2x32xf32> -> vector<2x32xf32>
    %53 = math.tanh %52 : vector<2x32xf32>
    %c32 = arith.constant 32 : index
    %c0_36 = arith.constant 0 : index
    %54 = vector.load %arg6[%c32, %c0_36] : memref<128x32xf32, #tpu.memory_space<vmem>>, vector<32x32xf32>
    %cst_37 = arith.constant dense<0.000000e+00> : vector<2x32xf32>
    %55 = tpu.matmul %53, %54, %cst_37 {dimension_numbers = #tpu.dot_dimension_numbers<[1], [0], [0], [1], [0, 0, 1, 1], [], []>} : vector<2x32xf32>, vector<32x32xf32>, vector<2x32xf32> -> vector<2x32xf32>
    %56 = math.tanh %55 : vector<2x32xf32>
    %c96 = arith.constant 96 : index
    %c0_38 = arith.constant 0 : index
    %57 = vector.load %arg6[%c96, %c0_38] : memref<128x32xf32, #tpu.memory_space<vmem>>, vector<32x16xf32>
    %cst_39 = arith.constant dense<0.000000e+00> : vector<2x16xf32>
    %58 = tpu.matmul %56, %57, %cst_39 {dimension_numbers = #tpu.dot_dimension_numbers<[1], [0], [0], [1], [0, 0, 1, 1], [], []>} : vector<2x32xf32>, vector<32x16xf32>, vector<2x16xf32> -> vector<2x16xf32>
    %59 = math.tanh %58 : vector<2x16xf32>
    %c0_40 = arith.constant 0 : index
    %c0_41 = arith.constant 0 : index
    %60 = vector.load %arg5[%c0_40, %c0_41] : memref<48x278xf32, #tpu.memory_space<vmem>>, vector<16x278xf32>
    %cst_42 = arith.constant dense<0.000000e+00> : vector<2x278xf32>
    %61 = tpu.matmul %59, %60, %cst_42 {dimension_numbers = #tpu.dot_dimension_numbers<[1], [0], [0], [1], [0, 0, 1, 1], [], []>} : vector<2x16xf32>, vector<16x278xf32>, vector<2x278xf32> -> vector<2x278xf32>
    %c16 = arith.constant 16 : index
    %c0_43 = arith.constant 0 : index
    %62 = vector.load %arg5[%c16, %c0_43] : memref<48x278xf32, #tpu.memory_space<vmem>>, vector<32x278xf32>
    %cst_44 = arith.constant dense<0.000000e+00> : vector<2x278xf32>
    %63 = tpu.matmul %49, %62, %cst_44 {dimension_numbers = #tpu.dot_dimension_numbers<[1], [0], [0], [1], [0, 0, 1, 1], [], []>} : vector<2x32xf32>, vector<32x278xf32>, vector<2x278xf32> -> vector<2x278xf32>
    %64 = arith.addf %61, %63 : vector<2x278xf32>
    %65 = vector.extract_strided_slice %64 {offsets = [0, 0], sizes = [2, 32], strides = [1, 1]} : vector<2x278xf32> to vector<2x32xf32>
    %cst_45 = arith.constant 0.000000e+00 : f32
    %66 = vector.broadcast %cst_45 : f32 to vector<2x32xf32>
    %67 = arith.maximumf %65, %66 : vector<2x32xf32>
    %c64 = arith.constant 64 : index
    %c0_46 = arith.constant 0 : index
    %68 = vector.load %arg6[%c64, %c0_46] : memref<128x32xf32, #tpu.memory_space<vmem>>, vector<32x32xf32>
    %cst_47 = arith.constant dense<0.000000e+00> : vector<2x32xf32>
    %69 = tpu.matmul %67, %68, %cst_47 {dimension_numbers = #tpu.dot_dimension_numbers<[1], [0], [0], [1], [0, 0, 1, 1], [], []>} : vector<2x32xf32>, vector<32x32xf32>, vector<2x32xf32> -> vector<2x32xf32>
    %cst_48 = arith.constant 0.000000e+00 : f32
    %70 = vector.broadcast %cst_48 : f32 to vector<2x32xf32>
    %71 = arith.maximumf %69, %70 : vector<2x32xf32>
    %c96_49 = arith.constant 96 : index
    %c16_50 = arith.constant 16 : index
    %72 = vector.load %arg6[%c96_49, %c16_50] : memref<128x32xf32, #tpu.memory_space<vmem>>, vector<32x1xf32>
    %cst_51 = arith.constant dense<0.000000e+00> : vector<2x1xf32>
    %73 = tpu.matmul %71, %72, %cst_51 {dimension_numbers = #tpu.dot_dimension_numbers<[1], [0], [0], [1], [0, 0, 1, 1], [], []>} : vector<2x32xf32>, vector<32x1xf32>, vector<2x1xf32> -> vector<2x1xf32>
    %c8 = arith.constant 8 : index
    %c0_52 = arith.constant 0 : index
    %74 = vector.load %arg6[%c8, %c0_52] : memref<128x32xf32, #tpu.memory_space<vmem>>, vector<1x1xf32>
    %75 = vector.broadcast %74 : vector<1x1xf32> to vector<2x1xf32>
    %76 = arith.addf %73, %75 : vector<2x1xf32>
    %77 = vector.extract_strided_slice %64 {offsets = [0, 128], sizes = [2, 150], strides = [1, 1]} : vector<2x278xf32> to vector<2x150xf32>
    %cst_53 = arith.constant dense<0xFF800000> : vector<2xf32>
    %78 = vector.multi_reduction <maximumf>, %77, %cst_53 [1] : vector<2x150xf32> to vector<2xf32>
    %79 = vector.shape_cast %78 : vector<2xf32> to vector<2x1xf32>
    %80 = vector.broadcast %79 : vector<2x1xf32> to vector<2x150xf32>
    %81 = arith.subf %77, %80 : vector<2x150xf32>
    %82 = math.exp %81 : vector<2x150xf32>
    %cst_54 = arith.constant dense<0.000000e+00> : vector<2xf32>
    %83 = vector.multi_reduction <add>, %82, %cst_54 [1] : vector<2x150xf32> to vector<2xf32>
    %84 = vector.shape_cast %83 : vector<2xf32> to vector<2x1xf32>
    %85 = math.log %84 : vector<2x1xf32>
    %86 = vector.broadcast %79 : vector<2x1xf32> to vector<2x150xf32>
    %87 = arith.subf %77, %86 : vector<2x150xf32>
    %88 = vector.broadcast %85 : vector<2x1xf32> to vector<2x150xf32>
    %89 = arith.subf %87, %88 : vector<2x150xf32>
    %c0_55 = arith.constant 0 : index
    %c0_56 = arith.constant 0 : index
    %90 = vector.load %arg7[%c0_55, %c0_56] : memref<2x384xf32, #tpu.memory_space<vmem>>, vector<2x16xf32>
    tpu.vector_store %arg7[%c0_55, %c0_56], %59 {strides = array<i32>} : memref<2x384xf32, #tpu.memory_space<vmem>>, vector<2x16xf32>,
    %c0_57 = arith.constant 0 : index
    %c16_58 = arith.constant 16 : index
    %91 = vector.load %arg7[%c0_57, %c16_58] : memref<2x384xf32, #tpu.memory_space<vmem>>, vector<2x32xf32>
    tpu.vector_store %arg7[%c0_57, %c16_58], %49 {strides = array<i32>} : memref<2x384xf32, #tpu.memory_space<vmem>>, vector<2x32xf32>,
    %c0_59 = arith.constant 0 : index
    %c48 = arith.constant 48 : index
    %92 = vector.load %arg7[%c0_59, %c48] : memref<2x384xf32, #tpu.memory_space<vmem>>, vector<2x1xf32>
    tpu.vector_store %arg7[%c0_59, %c48], %76 {strides = array<i32>} : memref<2x384xf32, #tpu.memory_space<vmem>>, vector<2x1xf32>,
    %c0_60 = arith.constant 0 : index
    %c128 = arith.constant 128 : index
    %93 = vector.load %arg7[%c0_60, %c128] : memref<2x384xf32, #tpu.memory_space<vmem>>, vector<2x150xf32>
    tpu.vector_store %arg7[%c0_60, %c128], %89 {strides = array<i32>} : memref<2x384xf32, #tpu.memory_space<vmem>>, vector<2x150xf32>,
    return
  }
  func.func @transform_0(%arg0: i32) -> (i32, i32, i32) {
    %c0_i32 = arith.constant 0 : i32
    %c0_i32_0 = arith.constant 0 : i32
    %c0_i32_1 = arith.constant 0 : i32
    %c0_i32_2 = arith.constant 0 : i32
    return %c0_i32, %c0_i32_0, %c0_i32_1 : i32, i32, i32
  }
  func.func @transform_1(%arg0: i32) -> (i32, i32) {
    %c0_i32 = arith.constant 0 : i32
    %c0_i32_0 = arith.constant 0 : i32
    %c0_i32_1 = arith.constant 0 : i32
    return %c0_i32, %c0_i32_0 : i32, i32
  }
  func.func @transform_2(%arg0: i32) -> (i32, i32) {
    %c0_i32 = arith.constant 0 : i32
    %c0_i32_0 = arith.constant 0 : i32
    %c0_i32_1 = arith.constant 0 : i32
    return %c0_i32, %c0_i32_0 : i32, i32
  }
  func.func @transform_3(%arg0: i32) -> (i32, i32) {
    %c0_i32 = arith.constant 0 : i32
    %c0_i32_0 = arith.constant 0 : i32
    %c0_i32_1 = arith.constant 0 : i32
    return %c0_i32, %c0_i32_0 : i32, i32
  }
  func.func @transform_4(%arg0: i32) -> (i32, i32) {
    %c0_i32 = arith.constant 0 : i32
    %c0_i32_0 = arith.constant 0 : i32
    %c0_i32_1 = arith.constant 0 : i32
    return %c0_i32, %c0_i32_0 : i32, i32
  }
  func.func @transform_5(%arg0: i32) -> (i32, i32) {
    %c0_i32 = arith.constant 0 : i32
    %c0_i32_0 = arith.constant 0 : i32
    %c0_i32_1 = arith.constant 0 : i32
    return %c0_i32, %c0_i32_0 : i32, i32
  }
  func.func @transform_6(%arg0: i32) -> (i32, i32) {
    %c0_i32 = arith.constant 0 : i32
    %c0_i32_0 = arith.constant 0 : i32
    %c0_i32_1 = arith.constant 0 : i32
    return %c0_i32, %c0_i32_0 : i32, i32
  }
}

</mosaic_0001>

<llo_original>
// kernel: forward.1
$region0: #{forward.1}
  #allocation0 [shape = 'u32[]', space=smem, size = 0x4, offset = 0x4, fixed_abs, tag = 'smem constant byte address 0x4 - core index']
  #allocation1 [shape = 'u32[144,128]{1,0:T(1,128)}', space=vmem, size = 0x12000, scoped, tag = 'internal scratch']
  %s0 = inlined_call_operand.vmem [shape: f32[4,14,252], index: 0, kind: input, shape index: {}]
  %s1 = inlined_call_operand.vmem [shape: f32[2,8], index: 1, kind: input, shape index: {}]
  %s2 = inlined_call_operand.vmem [shape: f32[253,56], index: 2, kind: input, shape index: {}]
  %s3 = inlined_call_operand.vmem [shape: f32[392,32], index: 3, kind: input, shape index: {}]
  %s4 = inlined_call_operand.vmem [shape: f32[48,278], index: 4, kind: input, shape index: {}]
  %s5 = inlined_call_operand.vmem [shape: f32[128,32], index: 5, kind: input, shape index: {}]
  %s6 = inlined_call_operand.vmem [shape: f32[2,384], index: 6, kind: output, shape index: {}]
  %s7 = sld [smem:[#allocation0]]
  $region34: #{forward.1} parent=0
    _
  %s9 = ssub.s32 1, %s7
  %s10 = scalar_select 0, %s9, %s7
  // Predicated region
  $region2: #{forward.1} parent=0 // pred_check
    _
  $region3: #{forward.1} parent=0 // pred_check_branch
    %12 = sbr.rel (0) target = $region5
  $region4: #{forward.1} parent=0 // pred_region
    _
  $region5: #{forward.1} parent=0 // pred_fallthru
    _
  // Predicated region
  $region6: #{forward.1} parent=0 // pred_check
    _
  $region7: #{forward.1} parent=0 // pred_check_branch
    %14 = sbr.rel (0) target = $region9
  $region8: #{forward.1} parent=0 // pred_region
    _
  $region9: #{forward.1} parent=0 // pred_fallthru
    _
  // Predicated region
  $region10: #{forward.1} parent=0 // pred_check
    _
  $region11: #{forward.1} parent=0 // pred_check_branch
    %16 = sbr.rel (0) target = $region13
  $region12: #{forward.1} parent=0 // pred_region
    _
  $region13: #{forward.1} parent=0 // pred_fallthru
    _
  // Predicated region
  $region14: #{forward.1} parent=0 // pred_check
    _
  $region15: #{forward.1} parent=0 // pred_check_branch
    %18 = sbr.rel (0) target = $region17
  $region16: #{forward.1} parent=0 // pred_region
    _
  $region17: #{forward.1} parent=0 // pred_fallthru
    _
  // Predicated region
  $region18: #{forward.1} parent=0 // pred_check
    _
  $region19: #{forward.1} parent=0 // pred_check_branch
    %20 = sbr.rel (0) target = $region21
  $region20: #{forward.1} parent=0 // pred_region
    _
  $region21: #{forward.1} parent=0 // pred_fallthru
    _
  // Predicated region
  $region22: #{forward.1} parent=0 // pred_check
    _
  $region23: #{forward.1} parent=0 // pred_check_branch
    %22 = sbr.rel (0) target = $region25
  $region24: #{forward.1} parent=0 // pred_region
    _
  $region25: #{forward.1} parent=0 // pred_fallthru
    _
  %v23 = vld [vmem:[%s2] sm:$0xff]
  %v24 = vld [vmem:[%s2 + $0x8] sm:$0xff]
  %v25 = vld [vmem:[%s2 + $0x10] sm:$0xff]
  %v26 = vld [vmem:[%s2 + $0x18] sm:$0xff]
  %v27 = vld [vmem:[%s2 + $0x20] sm:$0xff]
  %v28 = vld [vmem:[%s2 + $0x28] sm:$0xff]
  %v29 = vld [vmem:[%s2 + $0x30] sm:$0xff]
  %v30 = vld [vmem:[%s2 + $0x38] sm:$0xff]
  %v31 = vld [vmem:[%s2 + $0x40] sm:$0xff]
  %v32 = vld [vmem:[%s2 + $0x48] sm:$0xff]
  %v33 = vld [vmem:[%s2 + $0x50] sm:$0xff]
  %v34 = vld [vmem:[%s2 + $0x58] sm:$0xff]
  %v35 = vld [vmem:[%s2 + $0x60] sm:$0xff]
  %v36 = vld [vmem:[%s2 + $0x68] sm:$0xff]
  %v37 = vld [vmem:[%s2 + $0x70] sm:$0xff]
  %v38 = vld [vmem:[%s2 + $0x78] sm:$0xff]
  %v39 = vld [vmem:[%s2 + $0x80] sm:$0xff]
  %v40 = vld [vmem:[%s2 + $0x88] sm:$0xff]
  %v41 = vld [vmem:[%s2 + $0x90] sm:$0xff]
  %v42 = vld [vmem:[%s2 + $0x98] sm:$0xff]
  %v43 = vld [vmem:[%s2 + $0xa0] sm:$0xff]
  %v44 = vld [vmem:[%s2 + $0xa8] sm:$0xff]
  %v45 = vld [vmem:[%s2 + $0xb0] sm:$0xff]
  %v46 = vld [vmem:[%s2 + $0xb8] sm:$0xff]
  %v47 = vld [vmem:[%s2 + $0xc0] sm:$0xff]
  %v48 = vld [vmem:[%s2 + $0xc8] sm:$0xff]
  %v49 = vld [vmem:[%s2 + $0xd0] sm:$0xff]
  %v50 = vld [vmem:[%s2 + $0xd8] sm:$0xff]
  %v51 = vld [vmem:[%s2 + $0xe0] sm:$0xff]
  %v52 = vld [vmem:[%s2 + $0xe8] sm:$0xff]
  %v53 = vld [vmem:[%s2 + $0xf0] sm:$0xff]
  %v54 = vld [vmem:[%s2 + $0xf8] sm:$0xf]
  %v55 = vld [vmem:[%s0] sm:$0xff]
  %v56 = vld [vmem:[%s0 + $0x8] sm:$0xff]
  %v57 = vld [vmem:[%s0 + $0x10] sm:$0x3f]
  %v58 = vld [vmem:[%s0 + $0x18] sm:$0x3f]
  %vm59 = vcmask 1014784
  %v61 = vsel %vm59, %v56, 0
  %v64 = vsel %vm59, %v58, 0
  %vm66 = vcmask 1043456
  %v68 = vsel %vm66, %v54, 0
  %70 = vmatprep.subr.mxu0 0.0
  %71 = vmatpush1.msra.mxu0 %v38
  %72 = vmatprep.subr.mxu0 0.0
  %73 = vmatpush1.msra.mxu0 %v37
  %74 = vmatprep.subr.mxu0 0.0
  %75 = vmatpush1.msra.mxu0 %v36
  %76 = vmatprep.subr.mxu0 0.0
  %77 = vmatpush1.msra.mxu0 %v35
  %78 = vmatprep.subr.mxu0 0.0
  %79 = vmatpush1.msra.mxu0 %v34
  %80 = vmatprep.subr.mxu0 0.0
  %81 = vmatpush1.msra.mxu0 %v33
  %82 = vmatprep.subr.mxu0 0.0
  %83 = vmatpush1.msra.mxu0 %v32
  %84 = vmatprep.subr.mxu0 0.0
  %85 = vmatpush1.msra.mxu0 %v31
  %86 = vmatprep.subr.mxu0 0.0
  %87 = vmatpush1.msra.mxu0 %v30
  %88 = vmatprep.subr.mxu0 0.0
  %89 = vmatpush1.msra.mxu0 %v29
  %90 = vmatprep.subr.mxu0 0.0
  %91 = vmatpush1.msra.mxu0 %v28
  %92 = vmatprep.subr.mxu0 0.0
  %93 = vmatpush1.msra.mxu0 %v27
  %94 = vmatprep.subr.mxu0 0.0
  %95 = vmatpush1.msra.mxu0 %v26
  %96 = vmatprep.subr.mxu0 0.0
  %97 = vmatpush1.msra.mxu0 %v25
  %98 = vmatprep.subr.mxu0 0.0
  %99 = vmatpush1.msra.mxu0 %v24
  %100 = vmatprep.subr.mxu0 0.0
  %101 = vmatpush1.msra.mxu0 %v23
  %102 = vmatprep.subr.mxu0 0.0
  %103 = vmatpush2.msra.mxu0 %v68
  %104 = vmatprep.subr.mxu0 0.0
  %105 = vmatpush2.msra.mxu0 %v53
  %106 = vmatprep.subr.mxu0 0.0
  %107 = vmatpush2.msra.mxu0 %v52
  %108 = vmatprep.subr.mxu0 0.0
  %109 = vmatpush2.msra.mxu0 %v51
  %110 = vmatprep.subr.mxu0 0.0
  %111 = vmatpush2.msra.mxu0 %v50
  %112 = vmatprep.subr.mxu0 0.0
  %113 = vmatpush2.msra.mxu0 %v49
  %114 = vmatprep.subr.mxu0 0.0
  %115 = vmatpush2.msra.mxu0 %v48
  %116 = vmatprep.subr.mxu0 0.0
  %117 = vmatpush2.msra.mxu0 %v47
  %118 = vmatprep.subr.mxu0 0.0
  %119 = vmatpush2.msra.mxu0 %v46
  %120 = vmatprep.subr.mxu0 0.0
  %121 = vmatpush2.msra.mxu0 %v45
  %122 = vmatprep.subr.mxu0 0.0
  %123 = vmatpush2.msra.mxu0 %v44
  %124 = vmatprep.subr.mxu0 0.0
  %125 = vmatpush2.msra.mxu0 %v43
  %126 = vmatprep.subr.mxu0 0.0
  %127 = vmatpush2.msra.mxu0 %v42
  %128 = vmatprep.subr.mxu0 0.0
  %129 = vmatpush2.msra.mxu0 %v41
  %130 = vmatprep.subr.mxu0 0.0
  %131 = vmatpush2.msra.mxu0 %v40
  %132 = vmatprep.subr.mxu0 0.0
  %133 = vmatpush2.msra.mxu0 %v39
  %134 = vmatprep.mubr.f32.mxu0 %v61
  %135 = vmatmul.mubr.f32.gmra.mxu0 %v55
  %v136 = vpop.f32.mrf.mxu0
  %v137 = vadd.f32 0.0, %v136
  %v138 = vpop.f32.mrf.mxu0
  %139 = vmatprep.mubr.f32.mxu0 %v64
  %140 = vmatmul.mubr.f32.gmra.mxu0 %v57
  %v141 = vpop.f32.mrf.mxu0
  %v142 = vadd.f32 0.0, %v141
  %v143 = vpop.f32.mrf.mxu0
  %144 = vdwg.mxu0
  %s145 = scalar_lea.vmem %s0, 32
  %v146 = vld [vmem:[%s145] sm:$0xff]
  %v147 = vld [vmem:[%s145 + $0x8] sm:$0xff]
  %v148 = vld [vmem:[%s145 + $0x10] sm:$0x3f]
  %v149 = vld [vmem:[%s145 + $0x18] sm:$0x3f]
  %v151 = vsel %vm59, %v147, 0
  %v154 = vsel %vm59, %v149, 0
  %156 = vmatprep.subr.mxu0 0.0
  %157 = vmatpush1.msra.mxu0 %v38
  %158 = vmatprep.subr.mxu0 0.0
  %159 = vmatpush1.msra.mxu0 %v37
  %160 = vmatprep.subr.mxu0 0.0
  %161 = vmatpush1.msra.mxu0 %v36
  %162 = vmatprep.subr.mxu0 0.0
  %163 = vmatpush1.msra.mxu0 %v35
  %164 = vmatprep.subr.mxu0 0.0
  %165 = vmatpush1.msra.mxu0 %v34
  %166 = vmatprep.subr.mxu0 0.0
  %167 = vmatpush1.msra.mxu0 %v33
  %168 = vmatprep.subr.mxu0 0.0
  %169 = vmatpush1.msra.mxu0 %v32
  %170 = vmatprep.subr.mxu0 0.0
  %171 = vmatpush1.msra.mxu0 %v31
  %172 = vmatprep.subr.mxu0 0.0
  %173 = vmatpush1.msra.mxu0 %v30
  %174 = vmatprep.subr.mxu0 0.0
  %175 = vmatpush1.msra.mxu0 %v29
  %176 = vmatprep.subr.mxu0 0.0
  %177 = vmatpush1.msra.mxu0 %v28
  %178 = vmatprep.subr.mxu0 0.0
  %179 = vmatpush1.msra.mxu0 %v27
  %180 = vmatprep.subr.mxu0 0.0
  %181 = vmatpush1.msra.mxu0 %v26
  %182 = vmatprep.subr.mxu0 0.0
  %183 = vmatpush1.msra.mxu0 %v25
  %184 = vmatprep.subr.mxu0 0.0
  %185 = vmatpush1.msra.mxu0 %v24
  %186 = vmatprep.subr.mxu0 0.0
  %187 = vmatpush1.msra.mxu0 %v23
  %188 = vmatprep.subr.mxu0 0.0
  %189 = vmatpush2.msra.mxu0 %v68
  %190 = vmatprep.subr.mxu0 0.0
  %191 = vmatpush2.msra.mxu0 %v53
  %192 = vmatprep.subr.mxu0 0.0
  %193 = vmatpush2.msra.mxu0 %v52
  %194 = vmatprep.subr.mxu0 0.0
  %195 = vmatpush2.msra.mxu0 %v51
  %196 = vmatprep.subr.mxu0 0.0
  %197 = vmatpush2.msra.mxu0 %v50
  %198 = vmatprep.subr.mxu0 0.0
  %199 = vmatpush2.msra.mxu0 %v49
  %200 = vmatprep.subr.mxu0 0.0
  %201 = vmatpush2.msra.mxu0 %v48
  %202 = vmatprep.subr.mxu0 0.0
  %203 = vmatpush2.msra.mxu0 %v47
  %204 = vmatprep.subr.mxu0 0.0
  %205 = vmatpush2.msra.mxu0 %v46
  %206 = vmatprep.subr.mxu0 0.0
  %207 = vmatpush2.msra.mxu0 %v45
  %208 = vmatprep.subr.mxu0 0.0
  %209 = vmatpush2.msra.mxu0 %v44
  %210 = vmatprep.subr.mxu0 0.0
  %211 = vmatpush2.msra.mxu0 %v43
  %212 = vmatprep.subr.mxu0 0.0
  %213 = vmatpush2.msra.mxu0 %v42
  %214 = vmatprep.subr.mxu0 0.0
  %215 = vmatpush2.msra.mxu0 %v41
  %216 = vmatprep.subr.mxu0 0.0
  %217 = vmatpush2.msra.mxu0 %v40
  %218 = vmatprep.subr.mxu0 0.0
  %219 = vmatpush2.msra.mxu0 %v39
  %220 = vmatprep.mubr.f32.mxu0 %v151
  %221 = vmatmul.mubr.f32.gmra.mxu0 %v146
  %v222 = vpop.f32.mrf.mxu0
  %v223 = vadd.f32 0.0, %v222
  %v224 = vpop.f32.mrf.mxu0
  %225 = vmatprep.mubr.f32.mxu0 %v154
  %226 = vmatmul.mubr.f32.gmra.mxu0 %v148
  %v227 = vpop.f32.mrf.mxu0
  %v228 = vadd.f32 0.0, %v227
  %v229 = vpop.f32.mrf.mxu0
  %230 = vdwg.mxu0
  %v231 = vmax.f32 %v137, %v223
  %v232 = vmax.f32 %v142, %v228
  %s233 = scalar_lea.vmem %s0, 64
  %v234 = vld [vmem:[%s233] sm:$0xff]
  %v235 = vld [vmem:[%s233 + $0x8] sm:$0xff]
  %v236 = vld [vmem:[%s233 + $0x10] sm:$0x3f]
  %v237 = vld [vmem:[%s233 + $0x18] sm:$0x3f]
  %v239 = vsel %vm59, %v235, 0
  %v242 = vsel %vm59, %v237, 0
  %244 = vmatprep.subr.mxu0 0.0
  %245 = vmatpush1.msra.mxu0 %v38
  %246 = vmatprep.subr.mxu0 0.0
  %247 = vmatpush1.msra.mxu0 %v37
  %248 = vmatprep.subr.mxu0 0.0
  %249 = vmatpush1.msra.mxu0 %v36
  %250 = vmatprep.subr.mxu0 0.0
  %251 = vmatpush1.msra.mxu0 %v35
  %252 = vmatprep.subr.mxu0 0.0
  %253 = vmatpush1.msra.mxu0 %v34
  %254 = vmatprep.subr.mxu0 0.0
  %255 = vmatpush1.msra.mxu0 %v33
  %256 = vmatprep.subr.mxu0 0.0
  %257 = vmatpush1.msra.mxu0 %v32
  %258 = vmatprep.subr.mxu0 0.0
  %259 = vmatpush1.msra.mxu0 %v31
  %260 = vmatprep.subr.mxu0 0.0
  %261 = vmatpush1.msra.mxu0 %v30
  %262 = vmatprep.subr.mxu0 0.0
  %263 = vmatpush1.msra.mxu0 %v29
  %264 = vmatprep.subr.mxu0 0.0
  %265 = vmatpush1.msra.mxu0 %v28
  %266 = vmatprep.subr.mxu0 0.0
  %267 = vmatpush1.msra.mxu0 %v27
  %268 = vmatprep.subr.mxu0 0.0
  %269 = vmatpush1.msra.mxu0 %v26
  %270 = vmatprep.subr.mxu0 0.0
  %271 = vmatpush1.msra.mxu0 %v25
  %272 = vmatprep.subr.mxu0 0.0
  %273 = vmatpush1.msra.mxu0 %v24
  %274 = vmatprep.subr.mxu0 0.0
  %275 = vmatpush1.msra.mxu0 %v23
  %276 = vmatprep.subr.mxu0 0.0
  %277 = vmatpush2.msra.mxu0 %v68
  %278 = vmatprep.subr.mxu0 0.0
  %279 = vmatpush2.msra.mxu0 %v53
  %280 = vmatprep.subr.mxu0 0.0
  %281 = vmatpush2.msra.mxu0 %v52
  %282 = vmatprep.subr.mxu0 0.0
  %283 = vmatpush2.msra.mxu0 %v51
  %284 = vmatprep.subr.mxu0 0.0
  %285 = vmatpush2.msra.mxu0 %v50
  %286 = vmatprep.subr.mxu0 0.0
  %287 = vmatpush2.msra.mxu0 %v49
  %288 = vmatprep.subr.mxu0 0.0
  %289 = vmatpush2.msra.mxu0 %v48
  %290 = vmatprep.subr.mxu0 0.0
  %291 = vmatpush2.msra.mxu0 %v47
  %292 = vmatprep.subr.mxu0 0.0
  %293 = vmatpush2.msra.mxu0 %v46
  %294 = vmatprep.subr.mxu0 0.0
  %295 = vmatpush2.msra.mxu0 %v45
  %296 = vmatprep.subr.mxu0 0.0
  %297 = vmatpush2.msra.mxu0 %v44
  %298 = vmatprep.subr.mxu0 0.0
  %299 = vmatpush2.msra.mxu0 %v43
  %300 = vmatprep.subr.mxu0 0.0
  %301 = vmatpush2.msra.mxu0 %v42
  %302 = vmatprep.subr.mxu0 0.0
  %303 = vmatpush2.msra.mxu0 %v41
  %304 = vmatprep.subr.mxu0 0.0
  %305 = vmatpush2.msra.mxu0 %v40
  %306 = vmatprep.subr.mxu0 0.0
  %307 = vmatpush2.msra.mxu0 %v39
  %308 = vmatprep.mubr.f32.mxu0 %v239
  %309 = vmatmul.mubr.f32.gmra.mxu0 %v234
  %v310 = vpop.f32.mrf.mxu0
  %v311 = vadd.f32 0.0, %v310
  %v312 = vpop.f32.mrf.mxu0
  %313 = vmatprep.mubr.f32.mxu0 %v242
  %314 = vmatmul.mubr.f32.gmra.mxu0 %v236
  %v315 = vpop.f32.mrf.mxu0
  %v316 = vadd.f32 0.0, %v315
  %v317 = vpop.f32.mrf.mxu0
  %318 = vdwg.mxu0
  %v319 = vmax.f32 %v231, %v311
  %v320 = vmax.f32 %v232, %v316
  %s321 = scalar_lea.vmem %s0, 96
  %v322 = vld [vmem:[%s321] sm:$0xff]
  %v323 = vld [vmem:[%s321 + $0x8] sm:$0xff]
  %v324 = vld [vmem:[%s321 + $0x10] sm:$0x3f]
  %v325 = vld [vmem:[%s321 + $0x18] sm:$0x3f]
  %v327 = vsel %vm59, %v323, 0
  %v330 = vsel %vm59, %v325, 0
  %332 = vmatprep.subr.mxu0 0.0
  %333 = vmatpush1.msra.mxu0 %v38
  %334 = vmatprep.subr.mxu0 0.0
  %335 = vmatpush1.msra.mxu0 %v37
  %336 = vmatprep.subr.mxu0 0.0
  %337 = vmatpush1.msra.mxu0 %v36
  %338 = vmatprep.subr.mxu0 0.0
  %339 = vmatpush1.msra.mxu0 %v35
  %340 = vmatprep.subr.mxu0 0.0
  %341 = vmatpush1.msra.mxu0 %v34
  %342 = vmatprep.subr.mxu0 0.0
  %343 = vmatpush1.msra.mxu0 %v33
  %344 = vmatprep.subr.mxu0 0.0
  %345 = vmatpush1.msra.mxu0 %v32
  %346 = vmatprep.subr.mxu0 0.0
  %347 = vmatpush1.msra.mxu0 %v31
  %348 = vmatprep.subr.mxu0 0.0
  %349 = vmatpush1.msra.mxu0 %v30
  %350 = vmatprep.subr.mxu0 0.0
  %351 = vmatpush1.msra.mxu0 %v29
  %352 = vmatprep.subr.mxu0 0.0
  %353 = vmatpush1.msra.mxu0 %v28
  %354 = vmatprep.subr.mxu0 0.0
  %355 = vmatpush1.msra.mxu0 %v27
  %356 = vmatprep.subr.mxu0 0.0
  %357 = vmatpush1.msra.mxu0 %v26
  %358 = vmatprep.subr.mxu0 0.0
  %359 = vmatpush1.msra.mxu0 %v25
  %360 = vmatprep.subr.mxu0 0.0
  %361 = vmatpush1.msra.mxu0 %v24
  %362 = vmatprep.subr.mxu0 0.0
  %363 = vmatpush1.msra.mxu0 %v23
  %364 = vmatprep.subr.mxu0 0.0
  %365 = vmatpush2.msra.mxu0 %v68
  %366 = vmatprep.subr.mxu0 0.0
  %367 = vmatpush2.msra.mxu0 %v53
  %368 = vmatprep.subr.mxu0 0.0
  %369 = vmatpush2.msra.mxu0 %v52
  %370 = vmatprep.subr.mxu0 0.0
  %371 = vmatpush2.msra.mxu0 %v51
  %372 = vmatprep.subr.mxu0 0.0
  %373 = vmatpush2.msra.mxu0 %v50
  %374 = vmatprep.subr.mxu0 0.0
  %375 = vmatpush2.msra.mxu0 %v49
  %376 = vmatprep.subr.mxu0 0.0
  %377 = vmatpush2.msra.mxu0 %v48
  %378 = vmatprep.subr.mxu0 0.0
  %379 = vmatpush2.msra.mxu0 %v47
  %380 = vmatprep.subr.mxu0 0.0
  %381 = vmatpush2.msra.mxu0 %v46
  %382 = vmatprep.subr.mxu0 0.0
  %383 = vmatpush2.msra.mxu0 %v45
  %384 = vmatprep.subr.mxu0 0.0
  %385 = vmatpush2.msra.mxu0 %v44
  %386 = vmatprep.subr.mxu0 0.0
  %387 = vmatpush2.msra.mxu0 %v43
  %388 = vmatprep.subr.mxu0 0.0
  %389 = vmatpush2.msra.mxu0 %v42
  %390 = vmatprep.subr.mxu0 0.0
  %391 = vmatpush2.msra.mxu0 %v41
  %392 = vmatprep.subr.mxu0 0.0
  %393 = vmatpush2.msra.mxu0 %v40
  %394 = vmatprep.subr.mxu0 0.0
  %395 = vmatpush2.msra.mxu0 %v39
  %396 = vmatprep.mubr.f32.mxu0 %v327
  %397 = vmatmul.mubr.f32.gmra.mxu0 %v322
  %v398 = vpop.f32.mrf.mxu0
  %v399 = vadd.f32 0.0, %v398
  %v400 = vpop.f32.mrf.mxu0
  %401 = vmatprep.mubr.f32.mxu0 %v330
  %402 = vmatmul.mubr.f32.gmra.mxu0 %v324
  %v403 = vpop.f32.mrf.mxu0
  %v404 = vadd.f32 0.0, %v403
  %v405 = vpop.f32.mrf.mxu0
  %406 = vdwg.mxu0
  %v407 = vmax.f32 %v319, %v399
  %v408 = vmax.f32 %v320, %v404
  %v409 = vld [vmem:[%s2 + $0xfc] sm:$0x1]
  %v410 = vlaneseq
  %v411 = vshrl.u32 %v410, 7
  %v412 = vsub.s32 0, %v411
  %v413 = vrot.slane %v409, %v412
  %v414 = vadd.f32 %v407, %v413
  %v415 = vadd.f32 %v408, %v413
  %v416 = vmax.f32 %v414, 0.0
  %v417 = vmax.f32 %v415, 0.0
  %v418 = vld [vmem:[%s3] sm:$0xff]
  %v419 = vld [vmem:[%s3 + $0x8] sm:$0xff]
  %v420 = vld [vmem:[%s3 + $0x10] sm:$0xff]
  %v421 = vld [vmem:[%s3 + $0x18] sm:$0xff]
  %v422 = vld [vmem:[%s3 + $0x20] sm:$0xff]
  %v423 = vld [vmem:[%s3 + $0x28] sm:$0xff]
  %v424 = vld [vmem:[%s3 + $0x30] sm:$0xff]
  %v425 = vld [vmem:[%s3 + $0x38] sm:$0xff]
  %v426 = vld [vmem:[%s3 + $0x40] sm:$0xff]
  %v427 = vld [vmem:[%s3 + $0x48] sm:$0xff]
  %v428 = vld [vmem:[%s3 + $0x50] sm:$0xff]
  %v429 = vld [vmem:[%s3 + $0x58] sm:$0xff]
  %v430 = vld [vmem:[%s3 + $0x60] sm:$0xff]
  %v431 = vld [vmem:[%s3 + $0x68] sm:$0xff]
  %v433 = vrot.slane %v416, 2
  %vm434 = vcmask 457728
  %v435 = vsel %vm434, %v433, 0
  %437 = vmatprep.subr.mxu0 0.0
  %438 = vmatpush1.msra.mxu0 0.0
  %439 = vmatprep.subr.mxu0 0.0
  %440 = vmatpush1.msra.mxu0 0.0
  %441 = vmatprep.subr.mxu0 0.0
  %442 = vmatpush1.msra.mxu0 0.0
  %443 = vmatprep.subr.mxu0 0.0
  %444 = vmatpush1.msra.mxu0 0.0
  %445 = vmatprep.subr.mxu0 0.0
  %446 = vmatpush1.msra.mxu0 0.0
  %447 = vmatprep.subr.mxu0 0.0
  %448 = vmatpush1.msra.mxu0 0.0
  %449 = vmatprep.subr.mxu0 0.0
  %450 = vmatpush1.msra.mxu0 0.0
  %451 = vmatprep.subr.mxu0 0.0
  %452 = vmatpush1.msra.mxu0 0.0
  %453 = vmatprep.subr.mxu0 0.0
  %454 = vmatpush1.msra.mxu0 0.0
  %455 = vmatprep.subr.mxu0 0.0
  %456 = vmatpush1.msra.mxu0 %v431
  %457 = vmatprep.subr.mxu0 0.0
  %458 = vmatpush1.msra.mxu0 %v430
  %459 = vmatprep.subr.mxu0 0.0
  %460 = vmatpush1.msra.mxu0 %v429
  %461 = vmatprep.subr.mxu0 0.0
  %462 = vmatpush1.msra.mxu0 %v428
  %463 = vmatprep.subr.mxu0 0.0
  %464 = vmatpush1.msra.mxu0 %v427
  %465 = vmatprep.subr.mxu0 0.0
  %466 = vmatpush1.msra.mxu0 %v426
  %467 = vmatprep.subr.mxu0 0.0
  %468 = vmatpush1.msra.mxu0 %v425
  %469 = vmatprep.subr.mxu0 0.0
  %470 = vmatpush2.msra.mxu0 0.0
  %471 = vmatprep.subr.mxu0 0.0
  %472 = vmatpush2.msra.mxu0 0.0
  %473 = vmatprep.subr.mxu0 0.0
  %474 = vmatpush2.msra.mxu0 0.0
  %475 = vmatprep.subr.mxu0 0.0
  %476 = vmatpush2.msra.mxu0 0.0
  %477 = vmatprep.subr.mxu0 0.0
  %478 = vmatpush2.msra.mxu0 0.0
  %479 = vmatprep.subr.mxu0 0.0
  %480 = vmatpush2.msra.mxu0 0.0
  %481 = vmatprep.subr.mxu0 0.0
  %482 = vmatpush2.msra.mxu0 0.0
  %483 = vmatprep.subr.mxu0 0.0
  %484 = vmatpush2.msra.mxu0 0.0
  %485 = vmatprep.subr.mxu0 0.0
  %486 = vmatpush2.msra.mxu0 0.0
  %487 = vmatprep.subr.mxu0 0.0
  %488 = vmatpush2.msra.mxu0 0.0
  %489 = vmatprep.subr.mxu0 0.0
  %490 = vmatpush2.msra.mxu0 0.0
  %491 = vmatprep.subr.mxu0 0.0
  %492 = vmatpush2.msra.mxu0 0.0
  %493 = vmatprep.subr.mxu0 0.0
  %494 = vmatpush2.msra.mxu0 0.0
  %495 = vmatprep.subr.mxu0 0.0
  %496 = vmatpush2.msra.mxu0 0.0
  %497 = vmatprep.subr.mxu0 0.0
  %498 = vmatpush2.msra.mxu0 0.0
  %499 = vmatprep.subr.mxu0 0.0
  %500 = vmatpush2.msra.mxu0 0.0
  %501 = vmatprep.mubr.f32.mxu0 0.0
  %502 = vmatmul.mubr.f32.gmra.mxu0 %v435
  %v503 = vpop.f32.mrf.mxu0
  %v504 = vadd.f32 0.0, %v503
  %v505 = vpop.f32.mrf.mxu0
  %506 = vdwg.mxu0
  %v507 = vsel %vm434, %v416, 0
  %509 = vmatprep.subr.mxu0 0.0
  %510 = vmatpush1.msra.mxu0 0.0
  %511 = vmatprep.subr.mxu0 0.0
  %512 = vmatpush1.msra.mxu0 0.0
  %513 = vmatprep.subr.mxu0 0.0
  %514 = vmatpush1.msra.mxu0 0.0
  %515 = vmatprep.subr.mxu0 0.0
  %516 = vmatpush1.msra.mxu0 0.0
  %517 = vmatprep.subr.mxu0 0.0
  %518 = vmatpush1.msra.mxu0 0.0
  %519 = vmatprep.subr.mxu0 0.0
  %520 = vmatpush1.msra.mxu0 0.0
  %521 = vmatprep.subr.mxu0 0.0
  %522 = vmatpush1.msra.mxu0 0.0
  %523 = vmatprep.subr.mxu0 0.0
  %524 = vmatpush1.msra.mxu0 0.0
  %525 = vmatprep.subr.mxu0 0.0
  %526 = vmatpush1.msra.mxu0 0.0
  %527 = vmatprep.subr.mxu0 0.0
  %528 = vmatpush1.msra.mxu0 %v424
  %529 = vmatprep.subr.mxu0 0.0
  %530 = vmatpush1.msra.mxu0 %v423
  %531 = vmatprep.subr.mxu0 0.0
  %532 = vmatpush1.msra.mxu0 %v422
  %533 = vmatprep.subr.mxu0 0.0
  %534 = vmatpush1.msra.mxu0 %v421
  %535 = vmatprep.subr.mxu0 0.0
  %536 = vmatpush1.msra.mxu0 %v420
  %537 = vmatprep.subr.mxu0 0.0
  %538 = vmatpush1.msra.mxu0 %v419
  %539 = vmatprep.subr.mxu0 0.0
  %540 = vmatpush1.msra.mxu0 %v418
  %541 = vmatprep.subr.mxu0 0.0
  %542 = vmatpush2.msra.mxu0 0.0
  %543 = vmatprep.subr.mxu0 0.0
  %544 = vmatpush2.msra.mxu0 0.0
  %545 = vmatprep.subr.mxu0 0.0
  %546 = vmatpush2.msra.mxu0 0.0
  %547 = vmatprep.subr.mxu0 0.0
  %548 = vmatpush2.msra.mxu0 0.0
  %549 = vmatprep.subr.mxu0 0.0
  %550 = vmatpush2.msra.mxu0 0.0
  %551 = vmatprep.subr.mxu0 0.0
  %552 = vmatpush2.msra.mxu0 0.0
  %553 = vmatprep.subr.mxu0 0.0
  %554 = vmatpush2.msra.mxu0 0.0
  %555 = vmatprep.subr.mxu0 0.0
  %556 = vmatpush2.msra.mxu0 0.0
  %557 = vmatprep.subr.mxu0 0.0
  %558 = vmatpush2.msra.mxu0 0.0
  %559 = vmatprep.subr.mxu0 0.0
  %560 = vmatpush2.msra.mxu0 0.0
  %561 = vmatprep.subr.mxu0 0.0
  %562 = vmatpush2.msra.mxu0 0.0
  %563 = vmatprep.subr.mxu0 0.0
  %564 = vmatpush2.msra.mxu0 0.0
  %565 = vmatprep.subr.mxu0 0.0
  %566 = vmatpush2.msra.mxu0 0.0
  %567 = vmatprep.subr.mxu0 0.0
  %568 = vmatpush2.msra.mxu0 0.0
  %569 = vmatprep.subr.mxu0 0.0
  %570 = vmatpush2.msra.mxu0 0.0
  %571 = vmatprep.subr.mxu0 0.0
  %572 = vmatpush2.msra.mxu0 0.0
  %573 = vmatprep.mubr.f32.mxu0 0.0
  %574 = vmatmul.mubr.f32.gmra.mxu0 %v507
  %v575 = vpop.f32.mrf.mxu0
  %v576 = vadd.f32 %v504, %v575
  %v577 = vpop.f32.mrf.mxu0
  %578 = vdwg.mxu0
  %v579 = vld [vmem:[%s3 + $0x70] sm:$0xff]
  %v580 = vld [vmem:[%s3 + $0x78] sm:$0xff]
  %v581 = vld [vmem:[%s3 + $0x80] sm:$0xff]
  %v582 = vld [vmem:[%s3 + $0x88] sm:$0xff]
  %v583 = vld [vmem:[%s3 + $0x90] sm:$0xff]
  %v584 = vld [vmem:[%s3 + $0x98] sm:$0xff]
  %v585 = vld [vmem:[%s3 + $0xa0] sm:$0xff]
  %v586 = vrot.slane %v416, 4
  %v587 = vsel %vm434, %v586, 0
  %589 = vmatprep.subr.mxu0 0.0
  %590 = vmatpush1.msra.mxu0 0.0
  %591 = vmatprep.subr.mxu0 0.0
  %592 = vmatpush1.msra.mxu0 0.0
  %593 = vmatprep.subr.mxu0 0.0
  %594 = vmatpush1.msra.mxu0 0.0
  %595 = vmatprep.subr.mxu0 0.0
  %596 = vmatpush1.msra.mxu0 0.0
  %597 = vmatprep.subr.mxu0 0.0
  %598 = vmatpush1.msra.mxu0 0.0
  %599 = vmatprep.subr.mxu0 0.0
  %600 = vmatpush1.msra.mxu0 0.0
  %601 = vmatprep.subr.mxu0 0.0
  %602 = vmatpush1.msra.mxu0 0.0
  %603 = vmatprep.subr.mxu0 0.0
  %604 = vmatpush1.msra.mxu0 0.0
  %605 = vmatprep.subr.mxu0 0.0
  %606 = vmatpush1.msra.mxu0 0.0
  %607 = vmatprep.subr.mxu0 0.0
  %608 = vmatpush1.msra.mxu0 %v585
  %609 = vmatprep.subr.mxu0 0.0
  %610 = vmatpush1.msra.mxu0 %v584
  %611 = vmatprep.subr.mxu0 0.0
  %612 = vmatpush1.msra.mxu0 %v583
  %613 = vmatprep.subr.mxu0 0.0
  %614 = vmatpush1.msra.mxu0 %v582
  %615 = vmatprep.subr.mxu0 0.0
  %616 = vmatpush1.msra.mxu0 %v581
  %617 = vmatprep.subr.mxu0 0.0
  %618 = vmatpush1.msra.mxu0 %v580
  %619 = vmatprep.subr.mxu0 0.0
  %620 = vmatpush1.msra.mxu0 %v579
  %621 = vmatprep.subr.mxu0 0.0
  %622 = vmatpush2.msra.mxu0 0.0
  %623 = vmatprep.subr.mxu0 0.0
  %624 = vmatpush2.msra.mxu0 0.0
  %625 = vmatprep.subr.mxu0 0.0
  %626 = vmatpush2.msra.mxu0 0.0
  %627 = vmatprep.subr.mxu0 0.0
  %628 = vmatpush2.msra.mxu0 0.0
  %629 = vmatprep.subr.mxu0 0.0
  %630 = vmatpush2.msra.mxu0 0.0
  %631 = vmatprep.subr.mxu0 0.0
  %632 = vmatpush2.msra.mxu0 0.0
  %633 = vmatprep.subr.mxu0 0.0
  %634 = vmatpush2.msra.mxu0 0.0
  %635 = vmatprep.subr.mxu0 0.0
  %636 = vmatpush2.msra.mxu0 0.0
  %637 = vmatprep.subr.mxu0 0.0
  %638 = vmatpush2.msra.mxu0 0.0
  %639 = vmatprep.subr.mxu0 0.0
  %640 = vmatpush2.msra.mxu0 0.0
  %641 = vmatprep.subr.mxu0 0.0
  %642 = vmatpush2.msra.mxu0 0.0
  %643 = vmatprep.subr.mxu0 0.0
  %644 = vmatpush2.msra.mxu0 0.0
  %645 = vmatprep.subr.mxu0 0.0
  %646 = vmatpush2.msra.mxu0 0.0
  %647 = vmatprep.subr.mxu0 0.0
  %648 = vmatpush2.msra.mxu0 0.0
  %649 = vmatprep.subr.mxu0 0.0
  %650 = vmatpush2.msra.mxu0 0.0
  %651 = vmatprep.subr.mxu0 0.0
  %652 = vmatpush2.msra.mxu0 0.0
  %653 = vmatprep.mubr.f32.mxu0 0.0
  %654 = vmatmul.mubr.f32.gmra.mxu0 %v587
  %v655 = vpop.f32.mrf.mxu0
  %v656 = vadd.f32 0.0, %v655
  %v657 = vpop.f32.mrf.mxu0
  %658 = vdwg.mxu0
  %v659 = vadd.f32 %v576, %v656
  %v660 = vld [vmem:[%s3 + $0xa8] sm:$0xff]
  %v661 = vld [vmem:[%s3 + $0xb0] sm:$0xff]
  %v662 = vld [vmem:[%s3 + $0xb8] sm:$0xff]
  %v663 = vld [vmem:[%s3 + $0xc0] sm:$0xff]
  %v664 = vld [vmem:[%s3 + $0xc8] sm:$0xff]
  %v665 = vld [vmem:[%s3 + $0xd0] sm:$0xff]
  %v666 = vld [vmem:[%s3 + $0xd8] sm:$0xff]
  %v667 = vrot.slane %v416, 6
  %v668 = vsel %vm434, %v667, 0
  %670 = vmatprep.subr.mxu0 0.0
  %671 = vmatpush1.msra.mxu0 0.0
  %672 = vmatprep.subr.mxu0 0.0
  %673 = vmatpush1.msra.mxu0 0.0
  %674 = vmatprep.subr.mxu0 0.0
  %675 = vmatpush1.msra.mxu0 0.0
  %676 = vmatprep.subr.mxu0 0.0
  %677 = vmatpush1.msra.mxu0 0.0
  %678 = vmatprep.subr.mxu0 0.0
  %679 = vmatpush1.msra.mxu0 0.0
  %680 = vmatprep.subr.mxu0 0.0
  %681 = vmatpush1.msra.mxu0 0.0
  %682 = vmatprep.subr.mxu0 0.0
  %683 = vmatpush1.msra.mxu0 0.0
  %684 = vmatprep.subr.mxu0 0.0
  %685 = vmatpush1.msra.mxu0 0.0
  %686 = vmatprep.subr.mxu0 0.0
  %687 = vmatpush1.msra.mxu0 0.0
  %688 = vmatprep.subr.mxu0 0.0
  %689 = vmatpush1.msra.mxu0 %v666
  %690 = vmatprep.subr.mxu0 0.0
  %691 = vmatpush1.msra.mxu0 %v665
  %692 = vmatprep.subr.mxu0 0.0
  %693 = vmatpush1.msra.mxu0 %v664
  %694 = vmatprep.subr.mxu0 0.0
  %695 = vmatpush1.msra.mxu0 %v663
  %696 = vmatprep.subr.mxu0 0.0
  %697 = vmatpush1.msra.mxu0 %v662
  %698 = vmatprep.subr.mxu0 0.0
  %699 = vmatpush1.msra.mxu0 %v661
  %700 = vmatprep.subr.mxu0 0.0
  %701 = vmatpush1.msra.mxu0 %v660
  %702 = vmatprep.subr.mxu0 0.0
  %703 = vmatpush2.msra.mxu0 0.0
  %704 = vmatprep.subr.mxu0 0.0
  %705 = vmatpush2.msra.mxu0 0.0
  %706 = vmatprep.subr.mxu0 0.0
  %707 = vmatpush2.msra.mxu0 0.0
  %708 = vmatprep.subr.mxu0 0.0
  %709 = vmatpush2.msra.mxu0 0.0
  %710 = vmatprep.subr.mxu0 0.0
  %711 = vmatpush2.msra.mxu0 0.0
  %712 = vmatprep.subr.mxu0 0.0
  %713 = vmatpush2.msra.mxu0 0.0
  %714 = vmatprep.subr.mxu0 0.0
  %715 = vmatpush2.msra.mxu0 0.0
  %716 = vmatprep.subr.mxu0 0.0
  %717 = vmatpush2.msra.mxu0 0.0
  %718 = vmatprep.subr.mxu0 0.0
  %719 = vmatpush2.msra.mxu0 0.0
  %720 = vmatprep.subr.mxu0 0.0
  %721 = vmatpush2.msra.mxu0 0.0
  %722 = vmatprep.subr.mxu0 0.0
  %723 = vmatpush2.msra.mxu0 0.0
  %724 = vmatprep.subr.mxu0 0.0
  %725 = vmatpush2.msra.mxu0 0.0
  %726 = vmatprep.subr.mxu0 0.0
  %727 = vmatpush2.msra.mxu0 0.0
  %728 = vmatprep.subr.mxu0 0.0
  %729 = vmatpush2.msra.mxu0 0.0
  %730 = vmatprep.subr.mxu0 0.0
  %731 = vmatpush2.msra.mxu0 0.0
  %732 = vmatprep.subr.mxu0 0.0
  %733 = vmatpush2.msra.mxu0 0.0
  %734 = vmatprep.mubr.f32.mxu0 0.0
  %735 = vmatmul.mubr.f32.gmra.mxu0 %v668
  %v736 = vpop.f32.mrf.mxu0
  %v737 = vadd.f32 0.0, %v736
  %v738 = vpop.f32.mrf.mxu0
  %739 = vdwg.mxu0
  %v740 = vadd.f32 %v659, %v737
  %v741 = vld [vmem:[%s3 + $0xe0] sm:$0xff]
  %v742 = vld [vmem:[%s3 + $0xe8] sm:$0xff]
  %v743 = vld [vmem:[%s3 + $0xf0] sm:$0xff]
  %v744 = vld [vmem:[%s3 + $0xf8] sm:$0xff]
  %v745 = vld [vmem:[%s3 + $0x100] sm:$0xff]
  %v746 = vld [vmem:[%s3 + $0x108] sm:$0xff]
  %v747 = vld [vmem:[%s3 + $0x110] sm:$0xff]
  %v749 = vsel %vm434, %v417, 0
  %751 = vmatprep.subr.mxu0 0.0
  %752 = vmatpush1.msra.mxu0 0.0
  %753 = vmatprep.subr.mxu0 0.0
  %754 = vmatpush1.msra.mxu0 0.0
  %755 = vmatprep.subr.mxu0 0.0
  %756 = vmatpush1.msra.mxu0 0.0
  %757 = vmatprep.subr.mxu0 0.0
  %758 = vmatpush1.msra.mxu0 0.0
  %759 = vmatprep.subr.mxu0 0.0
  %760 = vmatpush1.msra.mxu0 0.0
  %761 = vmatprep.subr.mxu0 0.0
  %762 = vmatpush1.msra.mxu0 0.0
  %763 = vmatprep.subr.mxu0 0.0
  %764 = vmatpush1.msra.mxu0 0.0
  %765 = vmatprep.subr.mxu0 0.0
  %766 = vmatpush1.msra.mxu0 0.0
  %767 = vmatprep.subr.mxu0 0.0
  %768 = vmatpush1.msra.mxu0 0.0
  %769 = vmatprep.subr.mxu0 0.0
  %770 = vmatpush1.msra.mxu0 %v747
  %771 = vmatprep.subr.mxu0 0.0
  %772 = vmatpush1.msra.mxu0 %v746
  %773 = vmatprep.subr.mxu0 0.0
  %774 = vmatpush1.msra.mxu0 %v745
  %775 = vmatprep.subr.mxu0 0.0
  %776 = vmatpush1.msra.mxu0 %v744
  %777 = vmatprep.subr.mxu0 0.0
  %778 = vmatpush1.msra.mxu0 %v743
  %779 = vmatprep.subr.mxu0 0.0
  %780 = vmatpush1.msra.mxu0 %v742
  %781 = vmatprep.subr.mxu0 0.0
  %782 = vmatpush1.msra.mxu0 %v741
  %783 = vmatprep.subr.mxu0 0.0
  %784 = vmatpush2.msra.mxu0 0.0
  %785 = vmatprep.subr.mxu0 0.0
  %786 = vmatpush2.msra.mxu0 0.0
  %787 = vmatprep.subr.mxu0 0.0
  %788 = vmatpush2.msra.mxu0 0.0
  %789 = vmatprep.subr.mxu0 0.0
  %790 = vmatpush2.msra.mxu0 0.0
  %791 = vmatprep.subr.mxu0 0.0
  %792 = vmatpush2.msra.mxu0 0.0
  %793 = vmatprep.subr.mxu0 0.0
  %794 = vmatpush2.msra.mxu0 0.0
  %795 = vmatprep.subr.mxu0 0.0
  %796 = vmatpush2.msra.mxu0 0.0
  %797 = vmatprep.subr.mxu0 0.0
  %798 = vmatpush2.msra.mxu0 0.0
  %799 = vmatprep.subr.mxu0 0.0
  %800 = vmatpush2.msra.mxu0 0.0
  %801 = vmatprep.subr.mxu0 0.0
  %802 = vmatpush2.msra.mxu0 0.0
  %803 = vmatprep.subr.mxu0 0.0
  %804 = vmatpush2.msra.mxu0 0.0
  %805 = vmatprep.subr.mxu0 0.0
  %806 = vmatpush2.msra.mxu0 0.0
  %807 = vmatprep.subr.mxu0 0.0
  %808 = vmatpush2.msra.mxu0 0.0
  %809 = vmatprep.subr.mxu0 0.0
  %810 = vmatpush2.msra.mxu0 0.0
  %811 = vmatprep.subr.mxu0 0.0
  %812 = vmatpush2.msra.mxu0 0.0
  %813 = vmatprep.subr.mxu0 0.0
  %814 = vmatpush2.msra.mxu0 0.0
  %815 = vmatprep.mubr.f32.mxu0 0.0
  %816 = vmatmul.mubr.f32.gmra.mxu0 %v749
  %v817 = vpop.f32.mrf.mxu0
  %v818 = vadd.f32 0.0, %v817
  %v819 = vpop.f32.mrf.mxu0
  %820 = vdwg.mxu0
  %v821 = vadd.f32 %v740, %v818
  %v822 = vld [vmem:[%s3 + $0x118] sm:$0xff]
  %v823 = vld [vmem:[%s3 + $0x120] sm:$0xff]
  %v824 = vld [vmem:[%s3 + $0x128] sm:$0xff]
  %v825 = vld [vmem:[%s3 + $0x130] sm:$0xff]
  %v826 = vld [vmem:[%s3 + $0x138] sm:$0xff]
  %v827 = vld [vmem:[%s3 + $0x140] sm:$0xff]
  %v828 = vld [vmem:[%s3 + $0x148] sm:$0xff]
  %v829 = vrot.slane %v417, 2
  %v830 = vsel %vm434, %v829, 0
  %832 = vmatprep.subr.mxu0 0.0
  %833 = vmatpush1.msra.mxu0 0.0
  %834 = vmatprep.subr.mxu0 0.0
  %835 = vmatpush1.msra.mxu0 0.0
  %836 = vmatprep.subr.mxu0 0.0
  %837 = vmatpush1.msra.mxu0 0.0
  %838 = vmatprep.subr.mxu0 0.0
  %839 = vmatpush1.msra.mxu0 0.0
  %840 = vmatprep.subr.mxu0 0.0
  %841 = vmatpush1.msra.mxu0 0.0
  %842 = vmatprep.subr.mxu0 0.0
  %843 = vmatpush1.msra.mxu0 0.0
  %844 = vmatprep.subr.mxu0 0.0
  %845 = vmatpush1.msra.mxu0 0.0
  %846 = vmatprep.subr.mxu0 0.0
  %847 = vmatpush1.msra.mxu0 0.0
  %848 = vmatprep.subr.mxu0 0.0
  %849 = vmatpush1.msra.mxu0 0.0
  %850 = vmatprep.subr.mxu0 0.0
  %851 = vmatpush1.msra.mxu0 %v828
  %852 = vmatprep.subr.mxu0 0.0
  %853 = vmatpush1.msra.mxu0 %v827
  %854 = vmatprep.subr.mxu0 0.0
  %855 = vmatpush1.msra.mxu0 %v826
  %856 = vmatprep.subr.mxu0 0.0
  %857 = vmatpush1.msra.mxu0 %v825
  %858 = vmatprep.subr.mxu0 0.0
  %859 = vmatpush1.msra.mxu0 %v824
  %860 = vmatprep.subr.mxu0 0.0
  %861 = vmatpush1.msra.mxu0 %v823
  %862 = vmatprep.subr.mxu0 0.0
  %863 = vmatpush1.msra.mxu0 %v822
  %864 = vmatprep.subr.mxu0 0.0
  %865 = vmatpush2.msra.mxu0 0.0
  %866 = vmatprep.subr.mxu0 0.0
  %867 = vmatpush2.msra.mxu0 0.0
  %868 = vmatprep.subr.mxu0 0.0
  %869 = vmatpush2.msra.mxu0 0.0
  %870 = vmatprep.subr.mxu0 0.0
  %871 = vmatpush2.msra.mxu0 0.0
  %872 = vmatprep.subr.mxu0 0.0
  %873 = vmatpush2.msra.mxu0 0.0
  %874 = vmatprep.subr.mxu0 0.0
  %875 = vmatpush2.msra.mxu0 0.0
  %876 = vmatprep.subr.mxu0 0.0
  %877 = vmatpush2.msra.mxu0 0.0
  %878 = vmatprep.subr.mxu0 0.0
  %879 = vmatpush2.msra.mxu0 0.0
  %880 = vmatprep.subr.mxu0 0.0
  %881 = vmatpush2.msra.mxu0 0.0
  %882 = vmatprep.subr.mxu0 0.0
  %883 = vmatpush2.msra.mxu0 0.0
  %884 = vmatprep.subr.mxu0 0.0
  %885 = vmatpush2.msra.mxu0 0.0
  %886 = vmatprep.subr.mxu0 0.0
  %887 = vmatpush2.msra.mxu0 0.0
  %888 = vmatprep.subr.mxu0 0.0
  %889 = vmatpush2.msra.mxu0 0.0
  %890 = vmatprep.subr.mxu0 0.0
  %891 = vmatpush2.msra.mxu0 0.0
  %892 = vmatprep.subr.mxu0 0.0
  %893 = vmatpush2.msra.mxu0 0.0
  %894 = vmatprep.subr.mxu0 0.0
  %895 = vmatpush2.msra.mxu0 0.0
  %896 = vmatprep.mubr.f32.mxu0 0.0
  %897 = vmatmul.mubr.f32.gmra.mxu0 %v830
  %v898 = vpop.f32.mrf.mxu0
  %v899 = vadd.f32 0.0, %v898
  %v900 = vpop.f32.mrf.mxu0
  %901 = vdwg.mxu0
  %v902 = vadd.f32 %v821, %v899
  %v903 = vld [vmem:[%s3 + $0x150] sm:$0xff]
  %v904 = vld [vmem:[%s3 + $0x158] sm:$0xff]
  %v905 = vld [vmem:[%s3 + $0x160] sm:$0xff]
  %v906 = vld [vmem:[%s3 + $0x168] sm:$0xff]
  %v907 = vld [vmem:[%s3 + $0x170] sm:$0xff]
  %v908 = vld [vmem:[%s3 + $0x178] sm:$0xff]
  %v909 = vld [vmem:[%s3 + $0x180] sm:$0xff]
  %v910 = vrot.slane %v417, 4
  %v911 = vsel %vm434, %v910, 0
  %913 = vmatprep.subr.mxu0 0.0
  %914 = vmatpush1.msra.mxu0 0.0
  %915 = vmatprep.subr.mxu0 0.0
  %916 = vmatpush1.msra.mxu0 0.0
  %917 = vmatprep.subr.mxu0 0.0
  %918 = vmatpush1.msra.mxu0 0.0
  %919 = vmatprep.subr.mxu0 0.0
  %920 = vmatpush1.msra.mxu0 0.0
  %921 = vmatprep.subr.mxu0 0.0
  %922 = vmatpush1.msra.mxu0 0.0
  %923 = vmatprep.subr.mxu0 0.0
  %924 = vmatpush1.msra.mxu0 0.0
  %925 = vmatprep.subr.mxu0 0.0
  %926 = vmatpush1.msra.mxu0 0.0
  %927 = vmatprep.subr.mxu0 0.0
  %928 = vmatpush1.msra.mxu0 0.0
  %929 = vmatprep.subr.mxu0 0.0
  %930 = vmatpush1.msra.mxu0 0.0
  %931 = vmatprep.subr.mxu0 0.0
  %932 = vmatpush1.msra.mxu0 %v909
  %933 = vmatprep.subr.mxu0 0.0
  %934 = vmatpush1.msra.mxu0 %v908
  %935 = vmatprep.subr.mxu0 0.0
  %936 = vmatpush1.msra.mxu0 %v907
  %937 = vmatprep.subr.mxu0 0.0
  %938 = vmatpush1.msra.mxu0 %v906
  %939 = vmatprep.subr.mxu0 0.0
  %940 = vmatpush1.msra.mxu0 %v905
  %941 = vmatprep.subr.mxu0 0.0
  %942 = vmatpush1.msra.mxu0 %v904
  %943 = vmatprep.subr.mxu0 0.0
  %944 = vmatpush1.msra.mxu0 %v903
  %945 = vmatprep.subr.mxu0 0.0
  %946 = vmatpush2.msra.mxu0 0.0
  %947 = vmatprep.subr.mxu0 0.0
  %948 = vmatpush2.msra.mxu0 0.0
  %949 = vmatprep.subr.mxu0 0.0
  %950 = vmatpush2.msra.mxu0 0.0
  %951 = vmatprep.subr.mxu0 0.0
  %952 = vmatpush2.msra.mxu0 0.0
  %953 = vmatprep.subr.mxu0 0.0
  %954 = vmatpush2.msra.mxu0 0.0
  %955 = vmatprep.subr.mxu0 0.0
  %956 = vmatpush2.msra.mxu0 0.0
  %957 = vmatprep.subr.mxu0 0.0
  %958 = vmatpush2.msra.mxu0 0.0
  %959 = vmatprep.subr.mxu0 0.0
  %960 = vmatpush2.msra.mxu0 0.0
  %961 = vmatprep.subr.mxu0 0.0
  %962 = vmatpush2.msra.mxu0 0.0
  %963 = vmatprep.subr.mxu0 0.0
  %964 = vmatpush2.msra.mxu0 0.0
  %965 = vmatprep.subr.mxu0 0.0
  %966 = vmatpush2.msra.mxu0 0.0
  %967 = vmatprep.subr.mxu0 0.0
  %968 = vmatpush2.msra.mxu0 0.0
  %969 = vmatprep.subr.mxu0 0.0
  %970 = vmatpush2.msra.mxu0 0.0
  %971 = vmatprep.subr.mxu0 0.0
  %972 = vmatpush2.msra.mxu0 0.0
  %973 = vmatprep.subr.mxu0 0.0
  %974 = vmatpush2.msra.mxu0 0.0
  %975 = vmatprep.subr.mxu0 0.0
  %976 = vmatpush2.msra.mxu0 0.0
  %977 = vmatprep.mubr.f32.mxu0 0.0
  %978 = vmatmul.mubr.f32.gmra.mxu0 %v911
  %v979 = vpop.f32.mrf.mxu0
  %v980 = vadd.f32 0.0, %v979
  %v981 = vpop.f32.mrf.mxu0
  %982 = vdwg.mxu0
  %v983 = vadd.f32 %v902, %v980
  %v984 = vmax.f32 %v983, 0.0
  %v985 = vld [vmem:[%s1] sm:$0x3]
  %v986 = vld [vmem:[%s5] sm:$0xff]
  %vm987 = vcmask 64512
  %v989 = vsel %vm987, %v985, 0
  %991 = vmatprep.subr.mxu0 0.0
  %992 = vmatpush1.msra.mxu0 0.0
  %993 = vmatprep.subr.mxu0 0.0
  %994 = vmatpush1.msra.mxu0 0.0
  %995 = vmatprep.subr.mxu0 0.0
  %996 = vmatpush1.msra.mxu0 0.0
  %997 = vmatprep.subr.mxu0 0.0
  %998 = vmatpush1.msra.mxu0 0.0
  %999 = vmatprep.subr.mxu0 0.0
  %1000 = vmatpush1.msra.mxu0 0.0
  %1001 = vmatprep.subr.mxu0 0.0
  %1002 = vmatpush1.msra.mxu0 0.0
  %1003 = vmatprep.subr.mxu0 0.0
  %1004 = vmatpush1.msra.mxu0 0.0
  %1005 = vmatprep.subr.mxu0 0.0
  %1006 = vmatpush1.msra.mxu0 0.0
  %1007 = vmatprep.subr.mxu0 0.0
  %1008 = vmatpush1.msra.mxu0 0.0
  %1009 = vmatprep.subr.mxu0 0.0
  %1010 = vmatpush1.msra.mxu0 0.0
  %1011 = vmatprep.subr.mxu0 0.0
  %1012 = vmatpush1.msra.mxu0 0.0
  %1013 = vmatprep.subr.mxu0 0.0
  %1014 = vmatpush1.msra.mxu0 0.0
  %1015 = vmatprep.subr.mxu0 0.0
  %1016 = vmatpush1.msra.mxu0 0.0
  %1017 = vmatprep.subr.mxu0 0.0
  %1018 = vmatpush1.msra.mxu0 0.0
  %1019 = vmatprep.subr.mxu0 0.0
  %1020 = vmatpush1.msra.mxu0 0.0
  %1021 = vmatprep.subr.mxu0 0.0
  %1022 = vmatpush1.msra.mxu0 %v986
  %1023 = vmatprep.subr.mxu0 0.0
  %1024 = vmatpush2.msra.mxu0 0.0
  %1025 = vmatprep.subr.mxu0 0.0
  %1026 = vmatpush2.msra.mxu0 0.0
  %1027 = vmatprep.subr.mxu0 0.0
  %1028 = vmatpush2.msra.mxu0 0.0
  %1029 = vmatprep.subr.mxu0 0.0
  %1030 = vmatpush2.msra.mxu0 0.0
  %1031 = vmatprep.subr.mxu0 0.0
  %1032 = vmatpush2.msra.mxu0 0.0
  %1033 = vmatprep.subr.mxu0 0.0
  %1034 = vmatpush2.msra.mxu0 0.0
  %1035 = vmatprep.subr.mxu0 0.0
  %1036 = vmatpush2.msra.mxu0 0.0
  %1037 = vmatprep.subr.mxu0 0.0
  %1038 = vmatpush2.msra.mxu0 0.0
  %1039 = vmatprep.subr.mxu0 0.0
  %1040 = vmatpush2.msra.mxu0 0.0
  %1041 = vmatprep.subr.mxu0 0.0
  %1042 = vmatpush2.msra.mxu0 0.0
  %1043 = vmatprep.subr.mxu0 0.0
  %1044 = vmatpush2.msra.mxu0 0.0
  %1045 = vmatprep.subr.mxu0 0.0
  %1046 = vmatpush2.msra.mxu0 0.0
  %1047 = vmatprep.subr.mxu0 0.0
  %1048 = vmatpush2.msra.mxu0 0.0
  %1049 = vmatprep.subr.mxu0 0.0
  %1050 = vmatpush2.msra.mxu0 0.0
  %1051 = vmatprep.subr.mxu0 0.0
  %1052 = vmatpush2.msra.mxu0 0.0
  %1053 = vmatprep.subr.mxu0 0.0
  %1054 = vmatpush2.msra.mxu0 0.0
  %1055 = vmatprep.mubr.f32.mxu0 0.0
  %1056 = vmatmul.mubr.f32.gmra.mxu0 %v989
  %v1057 = vpop.f32.mrf.mxu0
  %v1058 = vadd.f32 0.0, %v1057
  %v1059 = vpop.f32.mrf.mxu0
  %1060 = vdwg.mxu0
  %v1061 = vtanh.pop %v1058
  %v1062 = vld [vmem:[%s5 + $0x20] sm:$0xff]
  %v1063 = vld [vmem:[%s5 + $0x28] sm:$0xff]
  %v1064 = vld [vmem:[%s5 + $0x30] sm:$0xff]
  %v1065 = vld [vmem:[%s5 + $0x38] sm:$0xff]
  %vm1066 = vcmask 261120
  %v1068 = vsel %vm1066, %v1061, 0
  %1070 = vmatprep.subr.mxu0 0.0
  %1071 = vmatpush1.msra.mxu0 0.0
  %1072 = vmatprep.subr.mxu0 0.0
  %1073 = vmatpush1.msra.mxu0 0.0
  %1074 = vmatprep.subr.mxu0 0.0
  %1075 = vmatpush1.msra.mxu0 0.0
  %1076 = vmatprep.subr.mxu0 0.0
  %1077 = vmatpush1.msra.mxu0 0.0
  %1078 = vmatprep.subr.mxu0 0.0
  %1079 = vmatpush1.msra.mxu0 0.0
  %1080 = vmatprep.subr.mxu0 0.0
  %1081 = vmatpush1.msra.mxu0 0.0
  %1082 = vmatprep.subr.mxu0 0.0
  %1083 = vmatpush1.msra.mxu0 0.0
  %1084 = vmatprep.subr.mxu0 0.0
  %1085 = vmatpush1.msra.mxu0 0.0
  %1086 = vmatprep.subr.mxu0 0.0
  %1087 = vmatpush1.msra.mxu0 0.0
  %1088 = vmatprep.subr.mxu0 0.0
  %1089 = vmatpush1.msra.mxu0 0.0
  %1090 = vmatprep.subr.mxu0 0.0
  %1091 = vmatpush1.msra.mxu0 0.0
  %1092 = vmatprep.subr.mxu0 0.0
  %1093 = vmatpush1.msra.mxu0 0.0
  %1094 = vmatprep.subr.mxu0 0.0
  %1095 = vmatpush1.msra.mxu0 %v1065
  %1096 = vmatprep.subr.mxu0 0.0
  %1097 = vmatpush1.msra.mxu0 %v1064
  %1098 = vmatprep.subr.mxu0 0.0
  %1099 = vmatpush1.msra.mxu0 %v1063
  %1100 = vmatprep.subr.mxu0 0.0
  %1101 = vmatpush1.msra.mxu0 %v1062
  %1102 = vmatprep.subr.mxu0 0.0
  %1103 = vmatpush2.msra.mxu0 0.0
  %1104 = vmatprep.subr.mxu0 0.0
  %1105 = vmatpush2.msra.mxu0 0.0
  %1106 = vmatprep.subr.mxu0 0.0
  %1107 = vmatpush2.msra.mxu0 0.0
  %1108 = vmatprep.subr.mxu0 0.0
  %1109 = vmatpush2.msra.mxu0 0.0
  %1110 = vmatprep.subr.mxu0 0.0
  %1111 = vmatpush2.msra.mxu0 0.0
  %1112 = vmatprep.subr.mxu0 0.0
  %1113 = vmatpush2.msra.mxu0 0.0
  %1114 = vmatprep.subr.mxu0 0.0
  %1115 = vmatpush2.msra.mxu0 0.0
  %1116 = vmatprep.subr.mxu0 0.0
  %1117 = vmatpush2.msra.mxu0 0.0
  %1118 = vmatprep.subr.mxu0 0.0
  %1119 = vmatpush2.msra.mxu0 0.0
  %1120 = vmatprep.subr.mxu0 0.0
  %1121 = vmatpush2.msra.mxu0 0.0
  %1122 = vmatprep.subr.mxu0 0.0
  %1123 = vmatpush2.msra.mxu0 0.0
  %1124 = vmatprep.subr.mxu0 0.0
  %1125 = vmatpush2.msra.mxu0 0.0
  %1126 = vmatprep.subr.mxu0 0.0
  %1127 = vmatpush2.msra.mxu0 0.0
  %1128 = vmatprep.subr.mxu0 0.0
  %1129 = vmatpush2.msra.mxu0 0.0
  %1130 = vmatprep.subr.mxu0 0.0
  %1131 = vmatpush2.msra.mxu0 0.0
  %1132 = vmatprep.subr.mxu0 0.0
  %1133 = vmatpush2.msra.mxu0 0.0
  %1134 = vmatprep.mubr.f32.mxu0 0.0
  %1135 = vmatmul.mubr.f32.gmra.mxu0 %v1068
  %v1136 = vpop.f32.mrf.mxu0
  %v1137 = vadd.f32 0.0, %v1136
  %v1138 = vpop.f32.mrf.mxu0
  %1139 = vdwg.mxu0
  %v1140 = vtanh.pop %v1137
  %v1141 = vld [vmem:[%s5 + $0x60] sm:$0xff]
  %v1142 = vld [vmem:[%s5 + $0x68] sm:$0xff]
  %v1143 = vld [vmem:[%s5 + $0x70] sm:$0xff]
  %v1144 = vld [vmem:[%s5 + $0x78] sm:$0xff]
  %v1146 = vsel %vm1066, %v1140, 0
  %1148 = vmatprep.subr.mxu0 0.0
  %1149 = vmatpush1.msra.mxu0 0.0
  %1150 = vmatprep.subr.mxu0 0.0
  %1151 = vmatpush1.msra.mxu0 0.0
  %1152 = vmatprep.subr.mxu0 0.0
  %1153 = vmatpush1.msra.mxu0 0.0
  %1154 = vmatprep.subr.mxu0 0.0
  %1155 = vmatpush1.msra.mxu0 0.0
  %1156 = vmatprep.subr.mxu0 0.0
  %1157 = vmatpush1.msra.mxu0 0.0
  %1158 = vmatprep.subr.mxu0 0.0
  %1159 = vmatpush1.msra.mxu0 0.0
  %1160 = vmatprep.subr.mxu0 0.0
  %1161 = vmatpush1.msra.mxu0 0.0
  %1162 = vmatprep.subr.mxu0 0.0
  %1163 = vmatpush1.msra.mxu0 0.0
  %1164 = vmatprep.subr.mxu0 0.0
  %1165 = vmatpush1.msra.mxu0 0.0
  %1166 = vmatprep.subr.mxu0 0.0
  %1167 = vmatpush1.msra.mxu0 0.0
  %1168 = vmatprep.subr.mxu0 0.0
  %1169 = vmatpush1.msra.mxu0 0.0
  %1170 = vmatprep.subr.mxu0 0.0
  %1171 = vmatpush1.msra.mxu0 0.0
  %1172 = vmatprep.subr.mxu0 0.0
  %1173 = vmatpush1.msra.mxu0 %v1144
  %1174 = vmatprep.subr.mxu0 0.0
  %1175 = vmatpush1.msra.mxu0 %v1143
  %1176 = vmatprep.subr.mxu0 0.0
  %1177 = vmatpush1.msra.mxu0 %v1142
  %1178 = vmatprep.subr.mxu0 0.0
  %1179 = vmatpush1.msra.mxu0 %v1141
  %1180 = vmatprep.subr.mxu0 0.0
  %1181 = vmatpush2.msra.mxu0 0.0
  %1182 = vmatprep.subr.mxu0 0.0
  %1183 = vmatpush2.msra.mxu0 0.0
  %1184 = vmatprep.subr.mxu0 0.0
  %1185 = vmatpush2.msra.mxu0 0.0
  %1186 = vmatprep.subr.mxu0 0.0
  %1187 = vmatpush2.msra.mxu0 0.0
  %1188 = vmatprep.subr.mxu0 0.0
  %1189 = vmatpush2.msra.mxu0 0.0
  %1190 = vmatprep.subr.mxu0 0.0
  %1191 = vmatpush2.msra.mxu0 0.0
  %1192 = vmatprep.subr.mxu0 0.0
  %1193 = vmatpush2.msra.mxu0 0.0
  %1194 = vmatprep.subr.mxu0 0.0
  %1195 = vmatpush2.msra.mxu0 0.0
  %1196 = vmatprep.subr.mxu0 0.0
  %1197 = vmatpush2.msra.mxu0 0.0
  %1198 = vmatprep.subr.mxu0 0.0
  %1199 = vmatpush2.msra.mxu0 0.0
  %1200 = vmatprep.subr.mxu0 0.0
  %1201 = vmatpush2.msra.mxu0 0.0
  %1202 = vmatprep.subr.mxu0 0.0
  %1203 = vmatpush2.msra.mxu0 0.0
  %1204 = vmatprep.subr.mxu0 0.0
  %1205 = vmatpush2.msra.mxu0 0.0
  %1206 = vmatprep.subr.mxu0 0.0
  %1207 = vmatpush2.msra.mxu0 0.0
  %1208 = vmatprep.subr.mxu0 0.0
  %1209 = vmatpush2.msra.mxu0 0.0
  %1210 = vmatprep.subr.mxu0 0.0
  %1211 = vmatpush2.msra.mxu0 0.0
  %1212 = vmatprep.mubr.f32.mxu0 0.0
  %1213 = vmatmul.mubr.f32.gmra.mxu0 %v1146
  %v1214 = vpop.f32.mrf.mxu0
  %v1215 = vadd.f32 0.0, %v1214
  %v1216 = vpop.f32.mrf.mxu0
  %1217 = vdwg.mxu0
  %v1218 = vtanh.pop %v1215
  %v1219 = vld [vmem:[%s4] sm:$0xff]
  %v1220 = vld [vmem:[%s4 + $0x8] sm:$0xff]
  %v1221 = vld [vmem:[%s4 + $0x10] sm:$0xff]
  %v1222 = vld [vmem:[%s4 + $0x18] sm:$0xff]
  %v1223 = vld [vmem:[%s4 + $0x20] sm:$0xff]
  %v1224 = vld [vmem:[%s4 + $0x28] sm:$0xff]
  %v1225 = vld [vmem:[%s4 + $0x30] sm:$0xff]
  %v1226 = vld [vmem:[%s4 + $0x38] sm:$0xff]
  %v1227 = vld [vmem:[%s4 + $0x40] sm:$0xff]
  %v1228 = vld [vmem:[%s4 + $0x48] sm:$0xff]
  %v1229 = vld [vmem:[%s4 + $0x50] sm:$0xff]
  %v1230 = vld [vmem:[%s4 + $0x58] sm:$0xff]
  %v1231 = vld [vmem:[%s4 + $0x60] sm:$0xff]
  %v1232 = vld [vmem:[%s4 + $0x68] sm:$0xff]
  %v1233 = vld [vmem:[%s4 + $0x70] sm:$0xff]
  %v1234 = vld [vmem:[%s4 + $0x78] sm:$0xff]
  %v1235 = vld [vmem:[%s4 + $0x80] sm:$0xff]
  %v1236 = vld [vmem:[%s4 + $0x88] sm:$0xff]
  %v1238 = vsel %vm1066, %v984, 0
  %1240 = vmatprep.subr.mxu0 0.0
  %1241 = vmatpush1.msra.mxu0 0.0
  %1242 = vmatprep.subr.mxu0 0.0
  %1243 = vmatpush1.msra.mxu0 0.0
  %1244 = vmatprep.subr.mxu0 0.0
  %1245 = vmatpush1.msra.mxu0 0.0
  %1246 = vmatprep.subr.mxu0 0.0
  %1247 = vmatpush1.msra.mxu0 0.0
  %1248 = vmatprep.subr.mxu0 0.0
  %1249 = vmatpush1.msra.mxu0 0.0
  %1250 = vmatprep.subr.mxu0 0.0
  %1251 = vmatpush1.msra.mxu0 0.0
  %1252 = vmatprep.subr.mxu0 0.0
  %1253 = vmatpush1.msra.mxu0 0.0
  %1254 = vmatprep.subr.mxu0 0.0
  %1255 = vmatpush1.msra.mxu0 0.0
  %1256 = vmatprep.subr.mxu0 0.0
  %1257 = vmatpush1.msra.mxu0 0.0
  %1258 = vmatprep.subr.mxu0 0.0
  %1259 = vmatpush1.msra.mxu0 0.0
  %1260 = vmatprep.subr.mxu0 0.0
  %1261 = vmatpush1.msra.mxu0 0.0
  %1262 = vmatprep.subr.mxu0 0.0
  %1263 = vmatpush1.msra.mxu0 0.0
  %1264 = vmatprep.subr.mxu0 %v1235
  %1265 = vmatpush1.msra.mxu0 %v1234
  %1266 = vmatprep.subr.mxu0 %v1232
  %1267 = vmatpush1.msra.mxu0 %v1231
  %1268 = vmatprep.subr.mxu0 %v1229
  %1269 = vmatpush1.msra.mxu0 %v1228
  %1270 = vmatprep.subr.mxu0 %v1226
  %1271 = vmatpush1.msra.mxu0 %v1225
  %1272 = vmatprep.subr.mxu0 0.0
  %1273 = vmatpush2.msra.mxu0 0.0
  %1274 = vmatprep.subr.mxu0 0.0
  %1275 = vmatpush2.msra.mxu0 0.0
  %1276 = vmatprep.subr.mxu0 0.0
  %1277 = vmatpush2.msra.mxu0 0.0
  %1278 = vmatprep.subr.mxu0 0.0
  %1279 = vmatpush2.msra.mxu0 0.0
  %1280 = vmatprep.subr.mxu0 0.0
  %1281 = vmatpush2.msra.mxu0 0.0
  %1282 = vmatprep.subr.mxu0 0.0
  %1283 = vmatpush2.msra.mxu0 0.0
  %1284 = vmatprep.subr.mxu0 0.0
  %1285 = vmatpush2.msra.mxu0 0.0
  %1286 = vmatprep.subr.mxu0 0.0
  %1287 = vmatpush2.msra.mxu0 0.0
  %1288 = vmatprep.subr.mxu0 0.0
  %1289 = vmatpush2.msra.mxu0 0.0
  %1290 = vmatprep.subr.mxu0 0.0
  %1291 = vmatpush2.msra.mxu0 0.0
  %1292 = vmatprep.subr.mxu0 0.0
  %1293 = vmatpush2.msra.mxu0 0.0
  %1294 = vmatprep.subr.mxu0 0.0
  %1295 = vmatpush2.msra.mxu0 0.0
  %1296 = vmatprep.subr.mxu0 0.0
  %1297 = vmatpush2.msra.mxu0 0.0
  %1298 = vmatprep.subr.mxu0 0.0
  %1299 = vmatpush2.msra.mxu0 0.0
  %1300 = vmatprep.subr.mxu0 0.0
  %1301 = vmatpush2.msra.mxu0 0.0
  %1302 = vmatprep.subr.mxu0 0.0
  %1303 = vmatpush2.msra.mxu0 0.0
  %1304 = vmatprep.mubr.f32.mxu0 0.0
  %1305 = vmatmul.mubr.f32.gmra.mxu0 %v1238
  %v1306 = vpop.f32.mrf.mxu0
  %v1307 = vadd.f32 0.0, %v1306
  %v1308 = vpop.f32.mrf.mxu0
  %v1309 = vadd.f32 0.0, %v1308
  %1310 = vdwg.mxu0
  %1311 = vmatprep.subr.mxu0 0.0
  %1312 = vmatpush1.msra.mxu0 0.0
  %1313 = vmatprep.subr.mxu0 0.0
  %1314 = vmatpush1.msra.mxu0 0.0
  %1315 = vmatprep.subr.mxu0 0.0
  %1316 = vmatpush1.msra.mxu0 0.0
  %1317 = vmatprep.subr.mxu0 0.0
  %1318 = vmatpush1.msra.mxu0 0.0
  %1319 = vmatprep.subr.mxu0 0.0
  %1320 = vmatpush1.msra.mxu0 0.0
  %1321 = vmatprep.subr.mxu0 0.0
  %1322 = vmatpush1.msra.mxu0 0.0
  %1323 = vmatprep.subr.mxu0 0.0
  %1324 = vmatpush1.msra.mxu0 0.0
  %1325 = vmatprep.subr.mxu0 0.0
  %1326 = vmatpush1.msra.mxu0 0.0
  %1327 = vmatprep.subr.mxu0 0.0
  %1328 = vmatpush1.msra.mxu0 0.0
  %1329 = vmatprep.subr.mxu0 0.0
  %1330 = vmatpush1.msra.mxu0 0.0
  %1331 = vmatprep.subr.mxu0 0.0
  %1332 = vmatpush1.msra.mxu0 0.0
  %1333 = vmatprep.subr.mxu0 0.0
  %1334 = vmatpush1.msra.mxu0 0.0
  %1335 = vmatprep.subr.mxu0 0.0
  %1336 = vmatpush1.msra.mxu0 %v1236
  %1337 = vmatprep.subr.mxu0 0.0
  %1338 = vmatpush1.msra.mxu0 %v1233
  %1339 = vmatprep.subr.mxu0 0.0
  %1340 = vmatpush1.msra.mxu0 %v1230
  %1341 = vmatprep.subr.mxu0 0.0
  %1342 = vmatpush1.msra.mxu0 %v1227
  %1343 = vmatprep.subr.mxu0 0.0
  %1344 = vmatpush2.msra.mxu0 0.0
  %1345 = vmatprep.subr.mxu0 0.0
  %1346 = vmatpush2.msra.mxu0 0.0
  %1347 = vmatprep.subr.mxu0 0.0
  %1348 = vmatpush2.msra.mxu0 0.0
  %1349 = vmatprep.subr.mxu0 0.0
  %1350 = vmatpush2.msra.mxu0 0.0
  %1351 = vmatprep.subr.mxu0 0.0
  %1352 = vmatpush2.msra.mxu0 0.0
  %1353 = vmatprep.subr.mxu0 0.0
  %1354 = vmatpush2.msra.mxu0 0.0
  %1355 = vmatprep.subr.mxu0 0.0
  %1356 = vmatpush2.msra.mxu0 0.0
  %1357 = vmatprep.subr.mxu0 0.0
  %1358 = vmatpush2.msra.mxu0 0.0
  %1359 = vmatprep.subr.mxu0 0.0
  %1360 = vmatpush2.msra.mxu0 0.0
  %1361 = vmatprep.subr.mxu0 0.0
  %1362 = vmatpush2.msra.mxu0 0.0
  %1363 = vmatprep.subr.mxu0 0.0
  %1364 = vmatpush2.msra.mxu0 0.0
  %1365 = vmatprep.subr.mxu0 0.0
  %1366 = vmatpush2.msra.mxu0 0.0
  %1367 = vmatprep.subr.mxu0 0.0
  %1368 = vmatpush2.msra.mxu0 0.0
  %1369 = vmatprep.subr.mxu0 0.0
  %1370 = vmatpush2.msra.mxu0 0.0
  %1371 = vmatprep.subr.mxu0 0.0
  %1372 = vmatpush2.msra.mxu0 0.0
  %1373 = vmatprep.subr.mxu0 0.0
  %1374 = vmatpush2.msra.mxu0 0.0
  %1375 = vmatprep.mubr.f32.mxu0 0.0
  %1376 = vmatmul.mubr.f32.gmra.mxu0 %v1238
  %v1377 = vpop.f32.mrf.mxu0
  %v1378 = vadd.f32 0.0, %v1377
  %v1379 = vpop.f32.mrf.mxu0
  %1380 = vdwg.mxu0
  %vm1381 = vcmask 130048
  %v1383 = vsel %vm1381, %v1218, 0
  %1385 = vmatprep.subr.mxu0 0.0
  %1386 = vmatpush1.msra.mxu0 0.0
  %1387 = vmatprep.subr.mxu0 0.0
  %1388 = vmatpush1.msra.mxu0 0.0
  %1389 = vmatprep.subr.mxu0 0.0
  %1390 = vmatpush1.msra.mxu0 0.0
  %1391 = vmatprep.subr.mxu0 0.0
  %1392 = vmatpush1.msra.mxu0 0.0
  %1393 = vmatprep.subr.mxu0 0.0
  %1394 = vmatpush1.msra.mxu0 0.0
  %1395 = vmatprep.subr.mxu0 0.0
  %1396 = vmatpush1.msra.mxu0 0.0
  %1397 = vmatprep.subr.mxu0 0.0
  %1398 = vmatpush1.msra.mxu0 0.0
  %1399 = vmatprep.subr.mxu0 0.0
  %1400 = vmatpush1.msra.mxu0 0.0
  %1401 = vmatprep.subr.mxu0 0.0
  %1402 = vmatpush1.msra.mxu0 0.0
  %1403 = vmatprep.subr.mxu0 0.0
  %1404 = vmatpush1.msra.mxu0 0.0
  %1405 = vmatprep.subr.mxu0 0.0
  %1406 = vmatpush1.msra.mxu0 0.0
  %1407 = vmatprep.subr.mxu0 0.0
  %1408 = vmatpush1.msra.mxu0 0.0
  %1409 = vmatprep.subr.mxu0 0.0
  %1410 = vmatpush1.msra.mxu0 0.0
  %1411 = vmatprep.subr.mxu0 0.0
  %1412 = vmatpush1.msra.mxu0 0.0
  %1413 = vmatprep.subr.mxu0 %v1223
  %1414 = vmatpush1.msra.mxu0 %v1222
  %1415 = vmatprep.subr.mxu0 %v1220
  %1416 = vmatpush1.msra.mxu0 %v1219
  %1417 = vmatprep.subr.mxu0 0.0
  %1418 = vmatpush2.msra.mxu0 0.0
  %1419 = vmatprep.subr.mxu0 0.0
  %1420 = vmatpush2.msra.mxu0 0.0
  %1421 = vmatprep.subr.mxu0 0.0
  %1422 = vmatpush2.msra.mxu0 0.0
  %1423 = vmatprep.subr.mxu0 0.0
  %1424 = vmatpush2.msra.mxu0 0.0
  %1425 = vmatprep.subr.mxu0 0.0
  %1426 = vmatpush2.msra.mxu0 0.0
  %1427 = vmatprep.subr.mxu0 0.0
  %1428 = vmatpush2.msra.mxu0 0.0
  %1429 = vmatprep.subr.mxu0 0.0
  %1430 = vmatpush2.msra.mxu0 0.0
  %1431 = vmatprep.subr.mxu0 0.0
  %1432 = vmatpush2.msra.mxu0 0.0
  %1433 = vmatprep.subr.mxu0 0.0
  %1434 = vmatpush2.msra.mxu0 0.0
  %1435 = vmatprep.subr.mxu0 0.0
  %1436 = vmatpush2.msra.mxu0 0.0
  %1437 = vmatprep.subr.mxu0 0.0
  %1438 = vmatpush2.msra.mxu0 0.0
  %1439 = vmatprep.subr.mxu0 0.0
  %1440 = vmatpush2.msra.mxu0 0.0
  %1441 = vmatprep.subr.mxu0 0.0
  %1442 = vmatpush2.msra.mxu0 0.0
  %1443 = vmatprep.subr.mxu0 0.0
  %1444 = vmatpush2.msra.mxu0 0.0
  %1445 = vmatprep.subr.mxu0 0.0
  %1446 = vmatpush2.msra.mxu0 0.0
  %1447 = vmatprep.subr.mxu0 0.0
  %1448 = vmatpush2.msra.mxu0 0.0
  %1449 = vmatprep.mubr.f32.mxu0 0.0
  %1450 = vmatmul.mubr.f32.gmra.mxu0 %v1383
  %v1451 = vpop.f32.mrf.mxu0
  %v1452 = vadd.f32 %v1307, %v1451
  %v1453 = vpop.f32.mrf.mxu0
  %v1454 = vadd.f32 %v1309, %v1453
  %1455 = vdwg.mxu0
  %1456 = vmatprep.subr.mxu0 0.0
  %1457 = vmatpush1.msra.mxu0 0.0
  %1458 = vmatprep.subr.mxu0 0.0
  %1459 = vmatpush1.msra.mxu0 0.0
  %1460 = vmatprep.subr.mxu0 0.0
  %1461 = vmatpush1.msra.mxu0 0.0
  %1462 = vmatprep.subr.mxu0 0.0
  %1463 = vmatpush1.msra.mxu0 0.0
  %1464 = vmatprep.subr.mxu0 0.0
  %1465 = vmatpush1.msra.mxu0 0.0
  %1466 = vmatprep.subr.mxu0 0.0
  %1467 = vmatpush1.msra.mxu0 0.0
  %1468 = vmatprep.subr.mxu0 0.0
  %1469 = vmatpush1.msra.mxu0 0.0
  %1470 = vmatprep.subr.mxu0 0.0
  %1471 = vmatpush1.msra.mxu0 0.0
  %1472 = vmatprep.subr.mxu0 0.0
  %1473 = vmatpush1.msra.mxu0 0.0
  %1474 = vmatprep.subr.mxu0 0.0
  %1475 = vmatpush1.msra.mxu0 0.0
  %1476 = vmatprep.subr.mxu0 0.0
  %1477 = vmatpush1.msra.mxu0 0.0
  %1478 = vmatprep.subr.mxu0 0.0
  %1479 = vmatpush1.msra.mxu0 0.0
  %1480 = vmatprep.subr.mxu0 0.0
  %1481 = vmatpush1.msra.mxu0 0.0
  %1482 = vmatprep.subr.mxu0 0.0
  %1483 = vmatpush1.msra.mxu0 0.0
  %1484 = vmatprep.subr.mxu0 0.0
  %1485 = vmatpush1.msra.mxu0 %v1224
  %1486 = vmatprep.subr.mxu0 0.0
  %1487 = vmatpush1.msra.mxu0 %v1221
  %1488 = vmatprep.subr.mxu0 0.0
  %1489 = vmatpush2.msra.mxu0 0.0
  %1490 = vmatprep.subr.mxu0 0.0
  %1491 = vmatpush2.msra.mxu0 0.0
  %1492 = vmatprep.subr.mxu0 0.0
  %1493 = vmatpush2.msra.mxu0 0.0
  %1494 = vmatprep.subr.mxu0 0.0
  %1495 = vmatpush2.msra.mxu0 0.0
  %1496 = vmatprep.subr.mxu0 0.0
  %1497 = vmatpush2.msra.mxu0 0.0
  %1498 = vmatprep.subr.mxu0 0.0
  %1499 = vmatpush2.msra.mxu0 0.0
  %1500 = vmatprep.subr.mxu0 0.0
  %1501 = vmatpush2.msra.mxu0 0.0
  %1502 = vmatprep.subr.mxu0 0.0
  %1503 = vmatpush2.msra.mxu0 0.0
  %1504 = vmatprep.subr.mxu0 0.0
  %1505 = vmatpush2.msra.mxu0 0.0
  %1506 = vmatprep.subr.mxu0 0.0
  %1507 = vmatpush2.msra.mxu0 0.0
  %1508 = vmatprep.subr.mxu0 0.0
  %1509 = vmatpush2.msra.mxu0 0.0
  %1510 = vmatprep.subr.mxu0 0.0
  %1511 = vmatpush2.msra.mxu0 0.0
  %1512 = vmatprep.subr.mxu0 0.0
  %1513 = vmatpush2.msra.mxu0 0.0
  %1514 = vmatprep.subr.mxu0 0.0
  %1515 = vmatpush2.msra.mxu0 0.0
  %1516 = vmatprep.subr.mxu0 0.0
  %1517 = vmatpush2.msra.mxu0 0.0
  %1518 = vmatprep.subr.mxu0 0.0
  %1519 = vmatpush2.msra.mxu0 0.0
  %1520 = vmatprep.mubr.f32.mxu0 0.0
  %1521 = vmatmul.mubr.f32.gmra.mxu0 %v1383
  %v1522 = vpop.f32.mrf.mxu0
  %v1523 = vadd.f32 %v1378, %v1522
  %v1524 = vpop.f32.mrf.mxu0
  %1525 = vdwg.mxu0
  %v1526 = vmax.f32 %v1452, 0.0
  %v1527 = vld [vmem:[%s5 + $0x40] sm:$0xff]
  %v1528 = vld [vmem:[%s5 + $0x48] sm:$0xff]
  %v1529 = vld [vmem:[%s5 + $0x50] sm:$0xff]
  %v1530 = vld [vmem:[%s5 + $0x58] sm:$0xff]
  %v1532 = vsel %vm1066, %v1526, 0
  %1534 = vmatprep.subr.mxu0 0.0
  %1535 = vmatpush1.msra.mxu0 0.0
  %1536 = vmatprep.subr.mxu0 0.0
  %1537 = vmatpush1.msra.mxu0 0.0
  %1538 = vmatprep.subr.mxu0 0.0
  %1539 = vmatpush1.msra.mxu0 0.0
  %1540 = vmatprep.subr.mxu0 0.0
  %1541 = vmatpush1.msra.mxu0 0.0
  %1542 = vmatprep.subr.mxu0 0.0
  %1543 = vmatpush1.msra.mxu0 0.0
  %1544 = vmatprep.subr.mxu0 0.0
  %1545 = vmatpush1.msra.mxu0 0.0
  %1546 = vmatprep.subr.mxu0 0.0
  %1547 = vmatpush1.msra.mxu0 0.0
  %1548 = vmatprep.subr.mxu0 0.0
  %1549 = vmatpush1.msra.mxu0 0.0
  %1550 = vmatprep.subr.mxu0 0.0
  %1551 = vmatpush1.msra.mxu0 0.0
  %1552 = vmatprep.subr.mxu0 0.0
  %1553 = vmatpush1.msra.mxu0 0.0
  %1554 = vmatprep.subr.mxu0 0.0
  %1555 = vmatpush1.msra.mxu0 0.0
  %1556 = vmatprep.subr.mxu0 0.0
  %1557 = vmatpush1.msra.mxu0 0.0
  %1558 = vmatprep.subr.mxu0 0.0
  %1559 = vmatpush1.msra.mxu0 %v1530
  %1560 = vmatprep.subr.mxu0 0.0
  %1561 = vmatpush1.msra.mxu0 %v1529
  %1562 = vmatprep.subr.mxu0 0.0
  %1563 = vmatpush1.msra.mxu0 %v1528
  %1564 = vmatprep.subr.mxu0 0.0
  %1565 = vmatpush1.msra.mxu0 %v1527
  %1566 = vmatprep.subr.mxu0 0.0
  %1567 = vmatpush2.msra.mxu0 0.0
  %1568 = vmatprep.subr.mxu0 0.0
  %1569 = vmatpush2.msra.mxu0 0.0
  %1570 = vmatprep.subr.mxu0 0.0
  %1571 = vmatpush2.msra.mxu0 0.0
  %1572 = vmatprep.subr.mxu0 0.0
  %1573 = vmatpush2.msra.mxu0 0.0
  %1574 = vmatprep.subr.mxu0 0.0
  %1575 = vmatpush2.msra.mxu0 0.0
  %1576 = vmatprep.subr.mxu0 0.0
  %1577 = vmatpush2.msra.mxu0 0.0
  %1578 = vmatprep.subr.mxu0 0.0
  %1579 = vmatpush2.msra.mxu0 0.0
  %1580 = vmatprep.subr.mxu0 0.0
  %1581 = vmatpush2.msra.mxu0 0.0
  %1582 = vmatprep.subr.mxu0 0.0
  %1583 = vmatpush2.msra.mxu0 0.0
  %1584 = vmatprep.subr.mxu0 0.0
  %1585 = vmatpush2.msra.mxu0 0.0
  %1586 = vmatprep.subr.mxu0 0.0
  %1587 = vmatpush2.msra.mxu0 0.0
  %1588 = vmatprep.subr.mxu0 0.0
  %1589 = vmatpush2.msra.mxu0 0.0
  %1590 = vmatprep.subr.mxu0 0.0
  %1591 = vmatpush2.msra.mxu0 0.0
  %1592 = vmatprep.subr.mxu0 0.0
  %1593 = vmatpush2.msra.mxu0 0.0
  %1594 = vmatprep.subr.mxu0 0.0
  %1595 = vmatpush2.msra.mxu0 0.0
  %1596 = vmatprep.subr.mxu0 0.0
  %1597 = vmatpush2.msra.mxu0 0.0
  %1598 = vmatprep.mubr.f32.mxu0 0.0
  %1599 = vmatmul.mubr.f32.gmra.mxu0 %v1532
  %v1600 = vpop.f32.mrf.mxu0
  %v1601 = vadd.f32 0.0, %v1600
  %v1602 = vpop.f32.mrf.mxu0
  %1603 = vdwg.mxu0
  %v1604 = vmax.f32 %v1601, 0.0
  %v1605 = vld [vmem:[%s5 + $0x8] sm:$0x1]
  %v1606 = vlaneseq
  %v1607 = vshrl.u32 %v1606, 7
  %v1608 = vsub.s32 0, %v1607
  %v1609 = vrot.slane %v1605, %v1608
  %1614 = vrot.lane.b32.xlu0 %v1141, 112
  %v1615 = vpop.permute.xlu0 %1614
  %1616 = vrot.lane.b32.xlu0 %v1142, 112
  %v1617 = vpop.permute.xlu0 %1616
  %1618 = vrot.lane.b32.xlu0 %v1143, 112
  %v1619 = vpop.permute.xlu0 %1618
  %1620 = vrot.lane.b32.xlu0 %v1144, 112
  %v1621 = vpop.permute.xlu0 %1620
  %v1627 = vsel %vm1066, %v1604, 0
  %1629 = vmatprep.subr.mxu0 0.0
  %1630 = vmatpush1.msra.mxu0 0.0
  %1631 = vmatprep.subr.mxu0 0.0
  %1632 = vmatpush1.msra.mxu0 0.0
  %1633 = vmatprep.subr.mxu0 0.0
  %1634 = vmatpush1.msra.mxu0 0.0
  %1635 = vmatprep.subr.mxu0 0.0
  %1636 = vmatpush1.msra.mxu0 0.0
  %1637 = vmatprep.subr.mxu0 0.0
  %1638 = vmatpush1.msra.mxu0 0.0
  %1639 = vmatprep.subr.mxu0 0.0
  %1640 = vmatpush1.msra.mxu0 0.0
  %1641 = vmatprep.subr.mxu0 0.0
  %1642 = vmatpush1.msra.mxu0 0.0
  %1643 = vmatprep.subr.mxu0 0.0
  %1644 = vmatpush1.msra.mxu0 0.0
  %1645 = vmatprep.subr.mxu0 0.0
  %1646 = vmatpush1.msra.mxu0 0.0
  %1647 = vmatprep.subr.mxu0 0.0
  %1648 = vmatpush1.msra.mxu0 0.0
  %1649 = vmatprep.subr.mxu0 0.0
  %1650 = vmatpush1.msra.mxu0 0.0
  %1651 = vmatprep.subr.mxu0 0.0
  %1652 = vmatpush1.msra.mxu0 0.0
  %1653 = vmatprep.subr.mxu0 0.0
  %1654 = vmatpush1.msra.mxu0 %v1621
  %1655 = vmatprep.subr.mxu0 0.0
  %1656 = vmatpush1.msra.mxu0 %v1619
  %1657 = vmatprep.subr.mxu0 0.0
  %1658 = vmatpush1.msra.mxu0 %v1617
  %1659 = vmatprep.subr.mxu0 0.0
  %1660 = vmatpush1.msra.mxu0 %v1615
  %1661 = vmatprep.subr.mxu0 0.0
  %1662 = vmatpush2.msra.mxu0 0.0
  %1663 = vmatprep.subr.mxu0 0.0
  %1664 = vmatpush2.msra.mxu0 0.0
  %1665 = vmatprep.subr.mxu0 0.0
  %1666 = vmatpush2.msra.mxu0 0.0
  %1667 = vmatprep.subr.mxu0 0.0
  %1668 = vmatpush2.msra.mxu0 0.0
  %1669 = vmatprep.subr.mxu0 0.0
  %1670 = vmatpush2.msra.mxu0 0.0
  %1671 = vmatprep.subr.mxu0 0.0
  %1672 = vmatpush2.msra.mxu0 0.0
  %1673 = vmatprep.subr.mxu0 0.0
  %1674 = vmatpush2.msra.mxu0 0.0
  %1675 = vmatprep.subr.mxu0 0.0
  %1676 = vmatpush2.msra.mxu0 0.0
  %1677 = vmatprep.subr.mxu0 0.0
  %1678 = vmatpush2.msra.mxu0 0.0
  %1679 = vmatprep.subr.mxu0 0.0
  %1680 = vmatpush2.msra.mxu0 0.0
  %1681 = vmatprep.subr.mxu0 0.0
  %1682 = vmatpush2.msra.mxu0 0.0
  %1683 = vmatprep.subr.mxu0 0.0
  %1684 = vmatpush2.msra.mxu0 0.0
  %1685 = vmatprep.subr.mxu0 0.0
  %1686 = vmatpush2.msra.mxu0 0.0
  %1687 = vmatprep.subr.mxu0 0.0
  %1688 = vmatpush2.msra.mxu0 0.0
  %1689 = vmatprep.subr.mxu0 0.0
  %1690 = vmatpush2.msra.mxu0 0.0
  %1691 = vmatprep.subr.mxu0 0.0
  %1692 = vmatpush2.msra.mxu0 0.0
  %1693 = vmatprep.mubr.f32.mxu0 0.0
  %1694 = vmatmul.mubr.f32.gmra.mxu0 %v1627
  %v1695 = vpop.f32.mrf.mxu0
  %v1696 = vadd.f32 %v1609, %v1695
  %v1697 = vpop.f32.mrf.mxu0
  %1698 = vdwg.mxu0
  %vm1699 = vcmask 1041408
  %v1700 = vsel %vm1699, %v1454, -inf
  %vm1701 = vcmask 173056
  %v1702 = vsel %vm1701, %v1523, -inf
  %v1703 = vmax.f32 %v1700, %v1702
  %1704 = vmax.xlane.f32.xlu0 %v1703
  %v1705 = vpop.xlane.xlu0 %1704
  %v1706 = vsub.f32 %v1454, %v1705
  %v1707 = vsub.f32 %v1523, %v1705
  %v1708 = vmul.f32 %v1706, 1.442695
  %v1709 = vpow.pop %v1708
  %v1710 = vmul.f32 %v1707, 1.442695
  %v1711 = vpow.pop %v1710
  %v1712 = vsel %vm1699, %v1709, 0.0
  %v1713 = vsel %vm1701, %v1711, 0.0
  %v1714 = vadd.f32 %v1712, %v1713
  %1715 = vadd.xlane.f32.xlu0 %v1714
  %v1716 = vpop.xlane.xlu0 %1715
  %v1717 = vlog2.pop %v1716
  %v1718 = vmul.f32 %v1717, 0.6931472
  %v1719 = vsub.f32 %v1706, %v1718
  %v1720 = vsub.f32 %v1707, %v1718
  %vm1721 = vcmask 123904
  %1722 = vst.msk [vmem:[%s6] sm:$0x3] %vm1721, %v1218
  %v1724 = vunpack.c.l.s4 1983009808
  %v1725 = vunpack.c.0.s8 %v1724
  %v1726 = vlaneseq
  %v1727 = vshrl.u32 %v1726, 7
  %v1728 = vsub.s32 %v1725, %v1727
  %v1729 = vrot.slane %v984, %v1728
  %1730 = vrot.lane.b32.xlu0 %v1729, 16
  %v1731 = vpop.permute.xlu0 %1730
  %vm1733 = vcmask 386176
  %1734 = vst.msk [vmem:[%s6] sm:$0x3] %vm1733, %v1731
  %v1737 = vunpack.c.l.s4 1983009808
  %v1738 = vunpack.c.0.s8 %v1737
  %v1739 = vlaneseq
  %v1740 = vshrl.u32 %v1739, 7
  %v1741 = vsub.s32 %v1738, %v1740
  %v1742 = vrot.slane %v1696, %v1741
  %1743 = vrot.lane.b32.xlu0 %v1742, 48
  %v1744 = vpop.permute.xlu0 %1743
  %vm1746 = vcmask 394624
  %1747 = vst.msk [vmem:[%s6] sm:$0x3] %vm1746, %v1744
  %v1750 = vcombine.low %v1719, %v1720
  %v1752 = vunpack.c.l.s4 1983009808
  %v1753 = vunpack.c.0.s8 %v1752
  %v1754 = vlaneseq
  %v1755 = vshrl.u32 %v1754, 7
  %v1756 = vsub.s32 %v1753, %v1755
  %v1757 = vrot.slane %v1750, %v1756
  %vm1759 = vcmask 175106
  %vm1760 = vmor %vm1759, %vm1699
  %1761 = vst.msk [vmem:[%s6 + $0x2] sm:$0xf] %vm1760, %v1757
  // Predicated region
  $region26: #{forward.1} parent=0 // pred_check
    _
  $region27: #{forward.1} parent=0 // pred_check_branch
    %1763 = sbr.rel (0) target = $region29
  $region28: #{forward.1} parent=0 // pred_region
    _
  $region29: #{forward.1} parent=0 // pred_fallthru
    _
  // Predicated region
  $region30: #{forward.1} parent=0 // pred_check
    _
  $region31: #{forward.1} parent=0 // pred_check_branch
    %1765 = sbr.rel (0) target = $region33
  $region32: #{forward.1} parent=0 // pred_region
    _
  $region33: #{forward.1} parent=0 // pred_fallthru
    _

</llo_original>
